<compile_context>
chip_gen: v7x
topology: tpu7x:2x2x1
jax: 0.10.0
libtpu: 0.0.40
codegen_flags: <defaults>
</compile_context>

<pallas_src>
import functools

import jax
import jax.numpy as jnp
from jax.experimental import pallas as pl
from jax.experimental.pallas import tpu as pltpu


def _wmsa_kernel(*refs, scale, num_heads, num_win, has_add, mxu_dtype):
    if has_add:
        q_ref, k_ref, v_ref, add_ref, o_ref = refs
    else:
        q_ref, k_ref, v_ref, o_ref = refs
        add_ref = None

    TB, N, C = q_ref.shape
    hd = C // num_heads

    outs = []
    for h in range(num_heads):                      # static head loop (see TODO above)
        lo = h * hd
        # Slice straight from the refs: nothing whole-block stays live across heads.
        # qk scale folded into the small (TB,N,hd) q slice, not the (TB,N,N) logits.
        qh = q_ref[:, :, lo:lo + hd] * scale
        kh = k_ref[:, :, lo:lo + hd]
        vh = v_ref[:, :, lo:lo + hd]
        if mxu_dtype is not None:
            # bf16 operands to the MXU (fp32 accumulation below): the fast MXU path on
            # v5e / v6e / v7x; negligible accuracy impact for attention weights.
            qh = qh.astype(mxu_dtype)
            kh = kh.astype(mxu_dtype)
            vh = vh.astype(mxu_dtype)

        # logits = (q*scale) @ k^T, batched over the TB windows, fp32 accumulation,
        # contraction on the last dims (no explicit k transpose).
        logits = jnp.einsum("bnd,bmd->bnm", qh, kh,
                            preferred_element_type=jnp.float32)       # (TB, N, N)

        if has_add:
            # Pre-fused (relative-position bias + shifted-window mask) table:
            # ONE fp32 add on the logits.  Block starts are multiples of nW, so the
            # local window id is t % nW — exactly the PyTorch view(+mask) add.
            if num_win == 1:
                logits = logits + add_ref[h, 0][None]                 # no reshape needed
            else:
                logits = (logits.reshape(TB // num_win, num_win, N, N)
                          + add_ref[h][None]).reshape(TB, N, N)

        # Numerically stable softmax; normalization deferred to after P@V so the divide
        # is only N*hd wide.  Exact divide (no approx reciprocal) per the review.
        m = jnp.max(logits, axis=-1, keepdims=True)
        p = jnp.exp(logits - m)
        s = jnp.sum(p, axis=-1, keepdims=True)

        pv = jnp.einsum("bnm,bmd->bnd", p.astype(vh.dtype), vh,
                        preferred_element_type=jnp.float32)           # (TB, N, hd)
        outs.append((pv / s).astype(o_ref.dtype))

    # Single lane-dense (TB, N, C) store; HBM writeback is a dense C-wide block.
    o_ref[...] = jnp.concatenate(outs, axis=-1)


def _vmem_limits():
    """Generation-aware VMEM policy: ~3/4 of the per-core capacity
    (48 MiB on v7x's 64 MiB, 96 MiB on v5e/v6e's 128 MiB)."""
    cap = 64 << 20                      # conservative default = v7x per-TensorCore VMEM
    try:
        info = pltpu.get_tpu_info()
        cap = int(getattr(info, "vmem_capacity_bytes", cap)) or cap
    except Exception:
        pass
    limit = min((cap * 3) // 4, 112 << 20)
    return cap, limit


def _block_vmem_bytes(tb, N, C, hd, in_item, out_item):
    """Footprint at block size tb windows, INCLUDING the in-kernel intermediates
    (the fp32 logits/p dominate for real Swin window sizes N=49/144)."""
    pipelined = 2 * tb * N * C * (3 * in_item + out_item)   # double-buffered q, k, v, out
    logits = 3 * tb * N * N * 4                             # fp32 logits + p (+ reshape slack)
    head_outs = tb * N * C * max(out_item, 4)               # per-head outputs pre-concat
    sliced = 3 * tb * N * hd * 4                            # live per-head q/k/v slices
    return pipelined + logits + head_outs + sliced


def _choose_block_windows(B_, nW, N, C, hd, in_item, out_item, budget_bytes):
    """Largest TB (multiple of nW, dividing B_) whose footprint fits the budget,
    preferring >=4 grid steps (DMA/compute overlap) and an even step count
    (balanced 2-TensorCore split on v7x / megacore)."""
    cands = [t for t in range(nW, B_ + 1, nW) if B_ % t == 0]
    fits = [t for t in cands
            if _block_vmem_bytes(t, N, C, hd, in_item, out_item) <= budget_bytes]
    if not fits:
        fits = [nW]
    steps = lambda t: B_ // t
    min_steps = 4 if B_ // nW >= 4 else (2 if B_ // nW >= 2 else 1)
    pool = [t for t in fits if steps(t) >= min_steps] or fits
    pool = [t for t in pool if steps(t) % 2 == 0] or pool
    return max(pool)


def window_attention_pallas(q, k, v, rel_bias=None, mask=None, num_heads=1,
                            mxu_dtype=jnp.bfloat16, block_windows=None):
    """q, k, v: (B_, N, C) = (num_windows*B, Wh*Ww, dim).
    rel_bias: (num_heads, N, N) or None (position_emd=False).
    mask: (nW, N, N) additive (0 / -inf style) or None.  Returns (B_, N, C)."""
    B_, N, C = q.shape
    assert C % num_heads == 0
    hd = C // num_heads
    scale = hd ** (-0.5)
    if mxu_dtype is not None and jnp.dtype(q.dtype).itemsize <= jnp.dtype(mxu_dtype).itemsize:
        mxu_dtype = None          # inputs already narrow: feed them to the MXU as-is

    # Fuse bias + mask into one fp32 additive table (H, nW, N, N); specialize away when absent.
    if rel_bias is None and mask is None:
        add, nW, has_add = None, 1, False
    else:
        b32 = None if rel_bias is None else rel_bias.astype(jnp.float32)
        m32 = None if mask is None else mask.astype(jnp.float32)
        if m32 is None:
            add = b32[:, None, :, :]                                       # (H, 1, N, N)
        elif b32 is None:
            add = jnp.broadcast_to(m32[None], (num_heads,) + m32.shape)    # (H, nW, N, N)
        else:
            add = b32[:, None, :, :] + m32[None, :, :, :]                  # (H, nW, N, N)
        nW, has_add = add.shape[1], True
    assert B_ % nW == 0, "B_ must be num_windows * B"

    in_item = jnp.dtype(q.dtype).itemsize
    out_item = in_item
    _, vmem_limit = _vmem_limits()
    resident = 0 if add is None else 2 * add.size * 4
    budget = max(vmem_limit - resident - (4 << 20), 1 << 20)
    TB = block_windows or _choose_block_windows(B_, nW, N, C, hd, in_item, out_item, budget)
    assert B_ % TB == 0 and TB % nW == 0

    qkv_spec = pl.BlockSpec((TB, N, C), lambda b: (b, 0, 0))
    out_spec = pl.BlockSpec((TB, N, C), lambda b: (b, 0, 0))
    in_specs = [qkv_spec, qkv_spec, qkv_spec]
    args = [q, k, v]
    if has_add:
        # Constant block index -> one DMA total, stays VMEM-resident across the grid.
        in_specs.append(pl.BlockSpec((num_heads, nW, N, N), lambda b: (0, 0, 0, 0)))
        args.append(add)

    cost = pl.CostEstimate(
        flops=4 * B_ * num_heads * N * N * hd,            # QK^T and P@V
        transcendentals=B_ * num_heads * N * N,           # exp
        bytes_accessed=4 * B_ * N * C * in_item + (0 if add is None else add.size * 4),
    )

    kernel = functools.partial(
        _wmsa_kernel, scale=scale, num_heads=num_heads, num_win=nW,
        has_add=has_add, mxu_dtype=mxu_dtype)

    return pl.pallas_call(
        kernel,
        out_shape=jax.ShapeDtypeStruct((B_, N, C), q.dtype),
        grid_spec=pltpu.PrefetchScalarGridSpec(
            num_scalar_prefetch=0,
            grid=(B_ // TB,),
            in_specs=in_specs,
            out_specs=out_spec,
        ),
        compiler_params=pltpu.CompilerParams(
            dimension_semantics=("parallel",),   # window blocks are independent
            vmem_limit_bytes=vmem_limit,
        ),
        cost_estimate=cost,
    )(*args)


def make_relative_position_bias(table, window_size, num_heads):
    """Replicates the PyTorch buffer construction; table: ((2Wh-1)(2Ww-1), H) -> (H, N, N)."""
    Wh, Ww = window_size
    coords_h = jnp.arange(Wh)
    coords_w = jnp.arange(Ww)
    coords = jnp.stack(jnp.meshgrid(coords_h, coords_w, indexing="ij"))    # (2, Wh, Ww)
    coords_flatten = coords.reshape(2, -1)                                  # (2, N)
    relative_coords = coords_flatten[:, :, None] - coords_flatten[:, None, :]
    relative_coords = relative_coords.transpose(1, 2, 0)                    # (N, N, 2)
    relative_coords = relative_coords.at[:, :, 0].add(Wh - 1)
    relative_coords = relative_coords.at[:, :, 1].add(Ww - 1)
    relative_coords = relative_coords.at[:, :, 0].multiply(2 * Ww - 1)
    relative_position_index = relative_coords.sum(-1)                       # (N, N)

    N = Wh * Ww
    bias = table[relative_position_index.reshape(-1)]                       # (N*N, H)
    bias = bias.reshape(N, N, num_heads).transpose(2, 0, 1)                 # (H, N, N)
    return bias


def reference_window_attention(q, k, v, rel_bias, mask, num_heads):
    B_, N, C = q.shape
    hd = C // num_heads
    scale = hd ** (-0.5)
    hi = jax.lax.Precision.HIGHEST
    qh = q.reshape(B_, N, num_heads, hd).transpose(0, 2, 1, 3) * scale
    kh = k.reshape(B_, N, num_heads, hd).transpose(0, 2, 1, 3)
    vh = v.reshape(B_, N, num_heads, hd).transpose(0, 2, 1, 3)
    attn = jnp.einsum("bhnd,bhmd->bhnm", qh, kh, precision=hi)
    if rel_bias is not None:
        attn = attn + rel_bias[None]
    if mask is not None:
        nW = mask.shape[0]
        attn = attn.reshape(B_ // nW, nW, num_heads, N, N) + mask[None, :, None]
        attn = attn.reshape(B_, num_heads, N, N)
    attn = jax.nn.softmax(attn, axis=-1)
    out = jnp.einsum("bhnm,bhmd->bhnd", attn, vh, precision=hi)
    return out.transpose(0, 2, 1, 3).reshape(B_, N, C)


if __name__ == "__main__":
    key = jax.random.PRNGKey(0)
    dim = 32
    num_heads = 4
    window_size = (4, 4)
    Wh, Ww = window_size
    N = Wh * Ww
    B = 2        # "real" batch
    nW = 2       # number of windows per image
    B_ = B * nW  # num_windows * B

    kq, kk, kv, kt, km = jax.random.split(key, 5)
    q = jax.random.normal(kq, (B_, N, dim), dtype=jnp.float32)
    k = jax.random.normal(kk, (B_, N, dim), dtype=jnp.float32)
    v = jax.random.normal(kv, (B_, N, dim), dtype=jnp.float32)

    # parameter init (deterministic): trunc_normal_(std=0.02) approximated by a
    # truncated normal * 0.02 (synthetic weights, not a checkpoint load)
    table = 0.02 * jax.random.truncated_normal(
        kt, -2.0, 2.0, ((2 * Wh - 1) * (2 * Ww - 1), num_heads), dtype=jnp.float32)
    rel_bias = make_relative_position_bias(table, window_size, num_heads)

    # shifted-window style additive mask: 0 / -100 per (window, N, N)
    mask_pattern = (jax.random.uniform(km, (nW, N, N)) > 0.7).astype(jnp.float32)
    mask = mask_pattern * (-100.0)

    ref = reference_window_attention(q, k, v, rel_bias, mask, num_heads)

    # 1) fp32-operand MXU path (tight parity check; tolerance covers possible
    #    reduced-precision MXU passes for fp32 operands on TPU).
    out_fp32 = jax.block_until_ready(
        window_attention_pallas(q, k, v, rel_bias, mask, num_heads, mxu_dtype=None))
    assert out_fp32.shape == (B_, N, dim)
    assert jnp.allclose(out_fp32, ref, atol=2e-2, rtol=2e-2)

    # 2) default fast path: bf16 MXU feeds with fp32 accumulation (tolerance covers
    #    bf16 rounding of the matmul operands).
    out_bf16 = jax.block_until_ready(
        window_attention_pallas(q, k, v, rel_bias, mask, num_heads))
    assert jnp.allclose(out_bf16, ref, atol=5e-2, rtol=5e-2)

    # 3) un-shifted / position_emd=False specialization (no bias, no mask): the
    #    kernel variant with no additive table, no reshape.
    ref_plain = reference_window_attention(q, k, v, None, None, num_heads)
    out_plain = jax.block_until_ready(
        window_attention_pallas(q, k, v, None, None, num_heads, mxu_dtype=None))
    assert jnp.allclose(out_plain, ref_plain, atol=2e-2, rtol=2e-2)

    print("KERNEL_OK")
</pallas_src>

<mosaic_0001>
module attributes {stable_mosaic.version = 11 : i64} {
  func.func @_wmsa_kernel(%arg0: i32, %arg1: memref<2x16x32xf32, #tpu.memory_space<vmem>>, %arg2: memref<2x16x32xf32, #tpu.memory_space<vmem>>, %arg3: memref<2x16x32xf32, #tpu.memory_space<vmem>>, %arg4: memref<4x2x16x16xf32, #tpu.memory_space<vmem>>, %arg5: memref<2x16x32xf32, #tpu.memory_space<vmem>>) attributes {dimension_semantics = [#tpu.dimension_semantics<parallel>], iteration_bounds = array<i64: 2>, scalar_prefetch = 0 : i64, scratch_operands = 0 : i64, tpu.core_type = #tpu.core_type<tc>, window_params = [{transform_indices = @transform_0, window_bounds = array<i64: 2, 16, 32>}, {transform_indices = @transform_1, window_bounds = array<i64: 2, 16, 32>}, {transform_indices = @transform_2, window_bounds = array<i64: 2, 16, 32>}, {pipeline_mode = #tpu.pipeline_mode<synchronous>, transform_indices = @transform_3, window_bounds = array<i64: 4, 2, 16, 16>}, {transform_indices = @transform_4, window_bounds = array<i64: 2, 16, 32>}]} {
    %c0 = arith.constant 0 : index
    %c0_0 = arith.constant 0 : index
    %c0_1 = arith.constant 0 : index
    %0 = vector.load %arg1[%c0, %c0_0, %c0_1] : memref<2x16x32xf32, #tpu.memory_space<vmem>>, vector<2x16x8xf32>
    %cst = arith.constant 0.353553385 : f32
    %1 = vector.broadcast %cst : f32 to vector<2x16x8xf32>
    %2 = arith.mulf %0, %1 : vector<2x16x8xf32>
    %c0_2 = arith.constant 0 : index
    %c0_3 = arith.constant 0 : index
    %c0_4 = arith.constant 0 : index
    %3 = vector.load %arg2[%c0_2, %c0_3, %c0_4] : memref<2x16x32xf32, #tpu.memory_space<vmem>>, vector<2x16x8xf32>
    %c0_5 = arith.constant 0 : index
    %c0_6 = arith.constant 0 : index
    %c0_7 = arith.constant 0 : index
    %4 = vector.load %arg3[%c0_5, %c0_6, %c0_7] : memref<2x16x32xf32, #tpu.memory_space<vmem>>, vector<2x16x8xf32>
    "tpu.trace_start"() <{level = 10 : i32, message = "bnd,bmd->bnm"}> : () -> ()
    %cst_8 = arith.constant dense<0.000000e+00> : vector<2x16x16xf32>
    %5 = tpu.matmul %2, %3, %cst_8 {dimension_numbers = #tpu.dot_dimension_numbers<[2], [2], [1], [1], [0, 0, 0, 1, 1, 1], [0], [0]>} : vector<2x16x8xf32>, vector<2x16x8xf32>, vector<2x16x16xf32> -> vector<2x16x16xf32>
    "tpu.trace_stop"() : () -> ()
    %6 = vector.shape_cast %5 : vector<2x16x16xf32> to vector<1x2x16x16xf32>
    %c0_9 = arith.constant 0 : index
    %c0_10 = arith.constant 0 : index
    %c0_11 = arith.constant 0 : index
    %c0_12 = arith.constant 0 : index
    %7 = vector.load %arg4[%c0_9, %c0_10, %c0_11, %c0_12] : memref<4x2x16x16xf32, #tpu.memory_space<vmem>>, vector<1x2x16x16xf32>
    %8 = vector.shape_cast %7 : vector<1x2x16x16xf32> to vector<2x16x16xf32>
    %9 = vector.shape_cast %8 : vector<2x16x16xf32> to vector<1x2x16x16xf32>
    %10 = arith.addf %6, %9 : vector<1x2x16x16xf32>
    %11 = vector.shape_cast %10 : vector<1x2x16x16xf32> to vector<2x16x16xf32>
    %cst_13 = arith.constant dense<0xFF800000> : vector<2x16xf32>
    %12 = vector.multi_reduction <maximumf>, %11, %cst_13 [2] : vector<2x16x16xf32> to vector<2x16xf32>
    %13 = vector.shape_cast %12 : vector<2x16xf32> to vector<2x16x1xf32>
    %14 = vector.broadcast %13 : vector<2x16x1xf32> to vector<2x16x16xf32>
    %15 = arith.subf %11, %14 : vector<2x16x16xf32>
    %16 = math.exp %15 : vector<2x16x16xf32>
    %cst_14 = arith.constant dense<0.000000e+00> : vector<2x16xf32>
    %17 = vector.multi_reduction <add>, %16, %cst_14 [2] : vector<2x16x16xf32> to vector<2x16xf32>
    %18 = vector.shape_cast %17 : vector<2x16xf32> to vector<2x16x1xf32>
    "tpu.trace_start"() <{level = 10 : i32, message = "bnm,bmd->bnd"}> : () -> ()
    %cst_15 = arith.constant dense<0.000000e+00> : vector<2x16x8xf32>
    %19 = tpu.matmul %16, %4, %cst_15 {dimension_numbers = #tpu.dot_dimension_numbers<[2], [1], [1], [2], [0, 0, 0, 1, 1, 2], [0], [0]>} : vector<2x16x16xf32>, vector<2x16x8xf32>, vector<2x16x8xf32> -> vector<2x16x8xf32>
    "tpu.trace_stop"() : () -> ()
    %20 = vector.broadcast %18 : vector<2x16x1xf32> to vector<2x16x8xf32>
    %21 = arith.divf %19, %20 : vector<2x16x8xf32>
    %c0_16 = arith.constant 0 : index
    %c0_17 = arith.constant 0 : index
    %c8 = arith.constant 8 : index
    %22 = vector.load %arg1[%c0_16, %c0_17, %c8] : memref<2x16x32xf32, #tpu.memory_space<vmem>>, vector<2x16x8xf32>
    %cst_18 = arith.constant 0.353553385 : f32
    %23 = vector.broadcast %cst_18 : f32 to vector<2x16x8xf32>
    %24 = arith.mulf %22, %23 : vector<2x16x8xf32>
    %c0_19 = arith.constant 0 : index
    %c0_20 = arith.constant 0 : index
    %c8_21 = arith.constant 8 : index
    %25 = vector.load %arg2[%c0_19, %c0_20, %c8_21] : memref<2x16x32xf32, #tpu.memory_space<vmem>>, vector<2x16x8xf32>
    %c0_22 = arith.constant 0 : index
    %c0_23 = arith.constant 0 : index
    %c8_24 = arith.constant 8 : index
    %26 = vector.load %arg3[%c0_22, %c0_23, %c8_24] : memref<2x16x32xf32, #tpu.memory_space<vmem>>, vector<2x16x8xf32>
    "tpu.trace_start"() <{level = 10 : i32, message = "bnd,bmd->bnm"}> : () -> ()
    %cst_25 = arith.constant dense<0.000000e+00> : vector<2x16x16xf32>
    %27 = tpu.matmul %24, %25, %cst_25 {dimension_numbers = #tpu.dot_dimension_numbers<[2], [2], [1], [1], [0, 0, 0, 1, 1, 1], [0], [0]>} : vector<2x16x8xf32>, vector<2x16x8xf32>, vector<2x16x16xf32> -> vector<2x16x16xf32>
    "tpu.trace_stop"() : () -> ()
    %28 = vector.shape_cast %27 : vector<2x16x16xf32> to vector<1x2x16x16xf32>
    %c1 = arith.constant 1 : index
    %c0_26 = arith.constant 0 : index
    %c0_27 = arith.constant 0 : index
    %c0_28 = arith.constant 0 : index
    %29 = vector.load %arg4[%c1, %c0_26, %c0_27, %c0_28] : memref<4x2x16x16xf32, #tpu.memory_space<vmem>>, vector<1x2x16x16xf32>
    %30 = vector.shape_cast %29 : vector<1x2x16x16xf32> to vector<2x16x16xf32>
    %31 = vector.shape_cast %30 : vector<2x16x16xf32> to vector<1x2x16x16xf32>
    %32 = arith.addf %28, %31 : vector<1x2x16x16xf32>
    %33 = vector.shape_cast %32 : vector<1x2x16x16xf32> to vector<2x16x16xf32>
    %cst_29 = arith.constant dense<0xFF800000> : vector<2x16xf32>
    %34 = vector.multi_reduction <maximumf>, %33, %cst_29 [2] : vector<2x16x16xf32> to vector<2x16xf32>
    %35 = vector.shape_cast %34 : vector<2x16xf32> to vector<2x16x1xf32>
    %36 = vector.broadcast %35 : vector<2x16x1xf32> to vector<2x16x16xf32>
    %37 = arith.subf %33, %36 : vector<2x16x16xf32>
    %38 = math.exp %37 : vector<2x16x16xf32>
    %cst_30 = arith.constant dense<0.000000e+00> : vector<2x16xf32>
    %39 = vector.multi_reduction <add>, %38, %cst_30 [2] : vector<2x16x16xf32> to vector<2x16xf32>
    %40 = vector.shape_cast %39 : vector<2x16xf32> to vector<2x16x1xf32>
    "tpu.trace_start"() <{level = 10 : i32, message = "bnm,bmd->bnd"}> : () -> ()
    %cst_31 = arith.constant dense<0.000000e+00> : vector<2x16x8xf32>
    %41 = tpu.matmul %38, %26, %cst_31 {dimension_numbers = #tpu.dot_dimension_numbers<[2], [1], [1], [2], [0, 0, 0, 1, 1, 2], [0], [0]>} : vector<2x16x16xf32>, vector<2x16x8xf32>, vector<2x16x8xf32> -> vector<2x16x8xf32>
    "tpu.trace_stop"() : () -> ()
    %42 = vector.broadcast %40 : vector<2x16x1xf32> to vector<2x16x8xf32>
    %43 = arith.divf %41, %42 : vector<2x16x8xf32>
    %c0_32 = arith.constant 0 : index
    %c0_33 = arith.constant 0 : index
    %c16 = arith.constant 16 : index
    %44 = vector.load %arg1[%c0_32, %c0_33, %c16] : memref<2x16x32xf32, #tpu.memory_space<vmem>>, vector<2x16x8xf32>
    %cst_34 = arith.constant 0.353553385 : f32
    %45 = vector.broadcast %cst_34 : f32 to vector<2x16x8xf32>
    %46 = arith.mulf %44, %45 : vector<2x16x8xf32>
    %c0_35 = arith.constant 0 : index
    %c0_36 = arith.constant 0 : index
    %c16_37 = arith.constant 16 : index
    %47 = vector.load %arg2[%c0_35, %c0_36, %c16_37] : memref<2x16x32xf32, #tpu.memory_space<vmem>>, vector<2x16x8xf32>
    %c0_38 = arith.constant 0 : index
    %c0_39 = arith.constant 0 : index
    %c16_40 = arith.constant 16 : index
    %48 = vector.load %arg3[%c0_38, %c0_39, %c16_40] : memref<2x16x32xf32, #tpu.memory_space<vmem>>, vector<2x16x8xf32>
    "tpu.trace_start"() <{level = 10 : i32, message = "bnd,bmd->bnm"}> : () -> ()
    %cst_41 = arith.constant dense<0.000000e+00> : vector<2x16x16xf32>
    %49 = tpu.matmul %46, %47, %cst_41 {dimension_numbers = #tpu.dot_dimension_numbers<[2], [2], [1], [1], [0, 0, 0, 1, 1, 1], [0], [0]>} : vector<2x16x8xf32>, vector<2x16x8xf32>, vector<2x16x16xf32> -> vector<2x16x16xf32>
    "tpu.trace_stop"() : () -> ()
    %50 = vector.shape_cast %49 : vector<2x16x16xf32> to vector<1x2x16x16xf32>
    %c2 = arith.constant 2 : index
    %c0_42 = arith.constant 0 : index
    %c0_43 = arith.constant 0 : index
    %c0_44 = arith.constant 0 : index
    %51 = vector.load %arg4[%c2, %c0_42, %c0_43, %c0_44] : memref<4x2x16x16xf32, #tpu.memory_space<vmem>>, vector<1x2x16x16xf32>
    %52 = vector.shape_cast %51 : vector<1x2x16x16xf32> to vector<2x16x16xf32>
    %53 = vector.shape_cast %52 : vector<2x16x16xf32> to vector<1x2x16x16xf32>
    %54 = arith.addf %50, %53 : vector<1x2x16x16xf32>
    %55 = vector.shape_cast %54 : vector<1x2x16x16xf32> to vector<2x16x16xf32>
    %cst_45 = arith.constant dense<0xFF800000> : vector<2x16xf32>
    %56 = vector.multi_reduction <maximumf>, %55, %cst_45 [2] : vector<2x16x16xf32> to vector<2x16xf32>
    %57 = vector.shape_cast %56 : vector<2x16xf32> to vector<2x16x1xf32>
    %58 = vector.broadcast %57 : vector<2x16x1xf32> to vector<2x16x16xf32>
    %59 = arith.subf %55, %58 : vector<2x16x16xf32>
    %60 = math.exp %59 : vector<2x16x16xf32>
    %cst_46 = arith.constant dense<0.000000e+00> : vector<2x16xf32>
    %61 = vector.multi_reduction <add>, %60, %cst_46 [2] : vector<2x16x16xf32> to vector<2x16xf32>
    %62 = vector.shape_cast %61 : vector<2x16xf32> to vector<2x16x1xf32>
    "tpu.trace_start"() <{level = 10 : i32, message = "bnm,bmd->bnd"}> : () -> ()
    %cst_47 = arith.constant dense<0.000000e+00> : vector<2x16x8xf32>
    %63 = tpu.matmul %60, %48, %cst_47 {dimension_numbers = #tpu.dot_dimension_numbers<[2], [1], [1], [2], [0, 0, 0, 1, 1, 2], [0], [0]>} : vector<2x16x16xf32>, vector<2x16x8xf32>, vector<2x16x8xf32> -> vector<2x16x8xf32>
    "tpu.trace_stop"() : () -> ()
    %64 = vector.broadcast %62 : vector<2x16x1xf32> to vector<2x16x8xf32>
    %65 = arith.divf %63, %64 : vector<2x16x8xf32>
    %c0_48 = arith.constant 0 : index
    %c0_49 = arith.constant 0 : index
    %c24 = arith.constant 24 : index
    %66 = vector.load %arg1[%c0_48, %c0_49, %c24] : memref<2x16x32xf32, #tpu.memory_space<vmem>>, vector<2x16x8xf32>
    %cst_50 = arith.constant 0.353553385 : f32
    %67 = vector.broadcast %cst_50 : f32 to vector<2x16x8xf32>
    %68 = arith.mulf %66, %67 : vector<2x16x8xf32>
    %c0_51 = arith.constant 0 : index
    %c0_52 = arith.constant 0 : index
    %c24_53 = arith.constant 24 : index
    %69 = vector.load %arg2[%c0_51, %c0_52, %c24_53] : memref<2x16x32xf32, #tpu.memory_space<vmem>>, vector<2x16x8xf32>
    %c0_54 = arith.constant 0 : index
    %c0_55 = arith.constant 0 : index
    %c24_56 = arith.constant 24 : index
    %70 = vector.load %arg3[%c0_54, %c0_55, %c24_56] : memref<2x16x32xf32, #tpu.memory_space<vmem>>, vector<2x16x8xf32>
    "tpu.trace_start"() <{level = 10 : i32, message = "bnd,bmd->bnm"}> : () -> ()
    %cst_57 = arith.constant dense<0.000000e+00> : vector<2x16x16xf32>
    %71 = tpu.matmul %68, %69, %cst_57 {dimension_numbers = #tpu.dot_dimension_numbers<[2], [2], [1], [1], [0, 0, 0, 1, 1, 1], [0], [0]>} : vector<2x16x8xf32>, vector<2x16x8xf32>, vector<2x16x16xf32> -> vector<2x16x16xf32>
    "tpu.trace_stop"() : () -> ()
    %72 = vector.shape_cast %71 : vector<2x16x16xf32> to vector<1x2x16x16xf32>
    %c3 = arith.constant 3 : index
    %c0_58 = arith.constant 0 : index
    %c0_59 = arith.constant 0 : index
    %c0_60 = arith.constant 0 : index
    %73 = vector.load %arg4[%c3, %c0_58, %c0_59, %c0_60] : memref<4x2x16x16xf32, #tpu.memory_space<vmem>>, vector<1x2x16x16xf32>
    %74 = vector.shape_cast %73 : vector<1x2x16x16xf32> to vector<2x16x16xf32>
    %75 = vector.shape_cast %74 : vector<2x16x16xf32> to vector<1x2x16x16xf32>
    %76 = arith.addf %72, %75 : vector<1x2x16x16xf32>
    %77 = vector.shape_cast %76 : vector<1x2x16x16xf32> to vector<2x16x16xf32>
    %cst_61 = arith.constant dense<0xFF800000> : vector<2x16xf32>
    %78 = vector.multi_reduction <maximumf>, %77, %cst_61 [2] : vector<2x16x16xf32> to vector<2x16xf32>
    %79 = vector.shape_cast %78 : vector<2x16xf32> to vector<2x16x1xf32>
    %80 = vector.broadcast %79 : vector<2x16x1xf32> to vector<2x16x16xf32>
    %81 = arith.subf %77, %80 : vector<2x16x16xf32>
    %82 = math.exp %81 : vector<2x16x16xf32>
    %cst_62 = arith.constant dense<0.000000e+00> : vector<2x16xf32>
    %83 = vector.multi_reduction <add>, %82, %cst_62 [2] : vector<2x16x16xf32> to vector<2x16xf32>
    %84 = vector.shape_cast %83 : vector<2x16xf32> to vector<2x16x1xf32>
    "tpu.trace_start"() <{level = 10 : i32, message = "bnm,bmd->bnd"}> : () -> ()
    %cst_63 = arith.constant dense<0.000000e+00> : vector<2x16x8xf32>
    %85 = tpu.matmul %82, %70, %cst_63 {dimension_numbers = #tpu.dot_dimension_numbers<[2], [1], [1], [2], [0, 0, 0, 1, 1, 2], [0], [0]>} : vector<2x16x16xf32>, vector<2x16x8xf32>, vector<2x16x8xf32> -> vector<2x16x8xf32>
    "tpu.trace_stop"() : () -> ()
    %86 = vector.broadcast %84 : vector<2x16x1xf32> to vector<2x16x8xf32>
    %87 = arith.divf %85, %86 : vector<2x16x8xf32>
    %88 = tpu.concatenate %21, %43, %65, %87 in 2 : vector<2x16x8xf32>, vector<2x16x8xf32>, vector<2x16x8xf32>, vector<2x16x8xf32> -> vector<2x16x32xf32>
    %c0_64 = arith.constant 0 : index
    %c0_65 = arith.constant 0 : index
    %c0_66 = arith.constant 0 : index
    %89 = vector.load %arg5[%c0_64, %c0_65, %c0_66] : memref<2x16x32xf32, #tpu.memory_space<vmem>>, vector<2x16x32xf32>
    tpu.vector_store %arg5[%c0_64, %c0_65, %c0_66], %88 {strides = array<i32>} : memref<2x16x32xf32, #tpu.memory_space<vmem>>, vector<2x16x32xf32>,
    return
  }
  func.func @transform_0(%arg0: i32) -> (i32, i32, i32) {
    %c0_i32 = arith.constant 0 : i32
    %c0_i32_0 = arith.constant 0 : i32
    %c0_i32_1 = arith.constant 0 : i32
    return %arg0, %c0_i32, %c0_i32_0 : i32, i32, i32
  }
  func.func @transform_1(%arg0: i32) -> (i32, i32, i32) {
    %c0_i32 = arith.constant 0 : i32
    %c0_i32_0 = arith.constant 0 : i32
    %c0_i32_1 = arith.constant 0 : i32
    return %arg0, %c0_i32, %c0_i32_0 : i32, i32, i32
  }
  func.func @transform_2(%arg0: i32) -> (i32, i32, i32) {
    %c0_i32 = arith.constant 0 : i32
    %c0_i32_0 = arith.constant 0 : i32
    %c0_i32_1 = arith.constant 0 : i32
    return %arg0, %c0_i32, %c0_i32_0 : i32, i32, i32
  }
  func.func @transform_3(%arg0: i32) -> (i32, i32, i32, i32) {
    %c0_i32 = arith.constant 0 : i32
    %c0_i32_0 = arith.constant 0 : i32
    %c0_i32_1 = arith.constant 0 : i32
    %c0_i32_2 = arith.constant 0 : i32
    %c0_i32_3 = arith.constant 0 : i32
    return %c0_i32, %c0_i32_0, %c0_i32_1, %c0_i32_2 : i32, i32, i32, i32
  }
  func.func @transform_4(%arg0: i32) -> (i32, i32, i32) {
    %c0_i32 = arith.constant 0 : i32
    %c0_i32_0 = arith.constant 0 : i32
    %c0_i32_1 = arith.constant 0 : i32
    return %arg0, %c0_i32, %c0_i32_0 : i32, i32, i32
  }
}

</mosaic_0001>

<llo_original>
// kernel: tpu_custom_call.1
$region0: #{tpu_custom_call.1}
  #allocation0 [shape = 'u32[]', space=smem, size = 0x4, offset = 0x4, fixed_abs, tag = 'smem constant byte address 0x4 - core index']
  #allocation1 [shape = 'u32[144,128]{1,0:T(1,128)}', space=vmem, size = 0x12000, scoped, tag = 'internal scratch']
  %s0 = inlined_call_operand.hbm [shape: f32[4,16,32], index: 0, kind: input, shape index: {}]
  %s1 = inlined_call_operand.hbm [shape: f32[4,16,32], index: 1, kind: input, shape index: {}]
  %s2 = inlined_call_operand.hbm [shape: f32[4,16,32], index: 2, kind: input, shape index: {}]
  %s3 = inlined_call_operand.hbm [shape: f32[4,2,16,16], index: 3, kind: input, shape index: {}]
  %s4 = inlined_call_operand.hbm [shape: f32[4,16,32], index: 4, kind: output, shape index: {}]
  %s5 = sld [smem:[#allocation0]]
  $region65: #{tpu_custom_call.1} parent=0
    _
  %s7 = ssub.s32 1, %s5
  %s8 = scalar_select 0, %s7, %s5
  $region1: #{tpu_custom_call.1} parent=0
    #allocation2 [shape = 'u8[32768]{0}', space=vmem, size = 0x8000, scoped, tag = 'input window, operand 0']
    #allocation3 [shape = 's32[2]{0}', space=sflag, size = 0x8, scoped, tag = 'scoped memory for tpu_custom_call.1']
    #allocation4 [shape = 's32[2]{0}', space=sflag, size = 0x8, scoped, tag = 'scoped memory for tpu_custom_call.1']
    #allocation5 [shape = 'u8[32768]{0}', space=vmem, size = 0x8000, scoped, tag = 'input window, operand 1']
    #allocation6 [shape = 's32[2]{0}', space=sflag, size = 0x8, scoped, tag = 'scoped memory for tpu_custom_call.1']
    #allocation7 [shape = 'u8[32768]{0}', space=vmem, size = 0x8000, scoped, tag = 'input window, operand 2']
    #allocation8 [shape = 'u8[65536]{0}', space=vmem, size = 0x10000, scoped, tag = 'input window, operand 3, single buffered']
    #allocation9 [shape = 's32[1]{0}', space=sflag, size = 0x4, scoped, tag = 'scoped memory for tpu_custom_call.1']
    #allocation10 [shape = 'u8[32768]{0}', space=vmem, size = 0x8000, scoped, tag = 'output window, operand 0']
    %9 = vsyncpa [#allocation3], 0
    %s10 = scalar_lea.sflag [#allocation3], 1
    %11 = vsyncpa %s10, 0
    %12 = vsyncpa [#allocation6], 0
    %s13 = scalar_lea.sflag [#allocation6], 1
    %14 = vsyncpa %s13, 0
    %15 = vsyncpa [#allocation9], 0
    %16 = vsyncpa [#allocation4], 0
    %s17 = scalar_lea.sflag [#allocation4], 1
    %18 = vsyncpa %s17, 0
    loop: start=0, step=1, limit=4
    $region2: #{tpu_custom_call.1} parent=1 // loop_pre_header
      _
    $region3: #{tpu_custom_call.1} parent=1 // loop_header
      %s20 = sphi 0, %s24
      %p21 = scmp.ge.s32.totalorder %s20, 4
      %s30 = sphi 0, %s32
      %s33 = sphi 0, %s30
      %s34 = sphi 0, %s33
      %s50 = sphi 0, %s34
      %s56 = sphi 0, %s58
      %s59 = sphi 0, %s56
      %s60 = sphi 0, %s59
      %s76 = sphi 0, %s60
      %s82 = sphi 0, %s84
      %s85 = sphi 0, %s82
      %s86 = sphi 0, %s85
      %s102 = sphi 0, %s86
      %s106 = sphi 0, %s106
      %s108 = sphi 0, %s106
      %s109 = sphi 0, %s108
      %s123 = sphi 0, %s109
      %s129 = sphi 0, %s131
      %s132 = sphi 0, %s129
      %s133 = sphi 0, %s132
      %s149 = sphi 0, %s133
    $region4: #{tpu_custom_call.1} parent=1 // loop_header_branch
      %23 = sbr.rel (%p21) target = $region8
    $region5: #{tpu_custom_call.1} parent=1 // loop_body
      %s25 = ssub.s32 %s20, 1
      %s26 = ssub.s32 %s20, 2
      %s27 = sadd.s32 %s20, 1
      %s28 = ssub.s32 %s20, %s27
      %p29 = scmp.eq.s32.totalorder %s28, 0
      %s31 = sadd.s32 %s30, 1
      %s32 = scalar_select %p29, %s30, %s31
      %p35 = pneg %p29
      %p36 = scmp.eq.s32.totalorder %s20, 1
      %p37 = por %p35, %p36
      %p38 = scmp.ne.s32.totalorder %s30, %s33
      %p39 = scmp.eq.s32.totalorder %s20, 0
      %p40 = por %p38, %p39
      %p41 = scmp.ne.s32.totalorder %s30, %s33
      %p42 = scmp.eq.s32.totalorder %s25, 1
      %p43 = por %p41, %p42
      %p44 = scmp.ne.s32.totalorder %s33, %s34
      %p45 = scmp.eq.s32.totalorder %s25, 0
      %p46 = por %p44, %p45
      %p47 = scmp.ne.s32.totalorder %s33, %s34
      %p48 = scmp.eq.s32.totalorder %s26, 1
      %p49 = por %p47, %p48
      %p51 = scmp.ne.s32.totalorder %s34, %s50
      %p52 = scmp.eq.s32.totalorder %s26, 0
      %p53 = por %p51, %p52
      %s54 = ssub.s32 %s20, %s27
      %p55 = scmp.eq.s32.totalorder %s54, 0
      %s57 = sadd.s32 %s56, 1
      %s58 = scalar_select %p55, %s56, %s57
      %p61 = pneg %p55
      %p62 = scmp.eq.s32.totalorder %s20, 1
      %p63 = por %p61, %p62
      %p64 = scmp.ne.s32.totalorder %s56, %s59
      %p65 = scmp.eq.s32.totalorder %s20, 0
      %p66 = por %p64, %p65
      %p67 = scmp.ne.s32.totalorder %s56, %s59
      %p68 = scmp.eq.s32.totalorder %s25, 1
      %p69 = por %p67, %p68
      %p70 = scmp.ne.s32.totalorder %s59, %s60
      %p71 = scmp.eq.s32.totalorder %s25, 0
      %p72 = por %p70, %p71
      %p73 = scmp.ne.s32.totalorder %s59, %s60
      %p74 = scmp.eq.s32.totalorder %s26, 1
      %p75 = por %p73, %p74
      %p77 = scmp.ne.s32.totalorder %s60, %s76
      %p78 = scmp.eq.s32.totalorder %s26, 0
      %p79 = por %p77, %p78
      %s80 = ssub.s32 %s20, %s27
      %p81 = scmp.eq.s32.totalorder %s80, 0
      %s83 = sadd.s32 %s82, 1
      %s84 = scalar_select %p81, %s82, %s83
      %p87 = pneg %p81
      %p88 = scmp.eq.s32.totalorder %s20, 1
      %p89 = por %p87, %p88
      %p90 = scmp.ne.s32.totalorder %s82, %s85
      %p91 = scmp.eq.s32.totalorder %s20, 0
      %p92 = por %p90, %p91
      %p93 = scmp.ne.s32.totalorder %s82, %s85
      %p94 = scmp.eq.s32.totalorder %s25, 1
      %p95 = por %p93, %p94
      %p96 = scmp.ne.s32.totalorder %s85, %s86
      %p97 = scmp.eq.s32.totalorder %s25, 0
      %p98 = por %p96, %p97
      %p99 = scmp.ne.s32.totalorder %s85, %s86
      %p100 = scmp.eq.s32.totalorder %s26, 1
      %p101 = por %p99, %p100
      %p103 = scmp.ne.s32.totalorder %s86, %s102
      %p104 = scmp.eq.s32.totalorder %s26, 0
      %p105 = por %p103, %p104
      %s107 = sadd.s32 %s106, 1
      %p110 = scmp.eq.s32.totalorder %s20, 1
      %p111 = scmp.ne.s32.totalorder %s106, %s108
      %p112 = scmp.eq.s32.totalorder %s20, 0
      %p113 = por %p111, %p112
      %p114 = scmp.ne.s32.totalorder %s106, %s108
      %p115 = scmp.eq.s32.totalorder %s25, 1
      %p116 = por %p114, %p115
      %p117 = scmp.ne.s32.totalorder %s108, %s109
      %p118 = scmp.eq.s32.totalorder %s25, 0
      %p119 = por %p117, %p118
      %p120 = scmp.ne.s32.totalorder %s108, %s109
      %p121 = scmp.eq.s32.totalorder %s26, 1
      %p122 = por %p120, %p121
      %p124 = scmp.ne.s32.totalorder %s109, %s123
      %p125 = scmp.eq.s32.totalorder %s26, 0
      %p126 = por %p124, %p125
      %s127 = ssub.s32 %s20, %s27
      %p128 = scmp.eq.s32.totalorder %s127, 0
      %s130 = sadd.s32 %s129, 1
      %s131 = scalar_select %p128, %s129, %s130
      %p134 = pneg %p128
      %p135 = scmp.eq.s32.totalorder %s20, 1
      %p136 = por %p134, %p135
      %p137 = scmp.ne.s32.totalorder %s129, %s132
      %p138 = scmp.eq.s32.totalorder %s20, 0
      %p139 = por %p137, %p138
      %p140 = scmp.ne.s32.totalorder %s129, %s132
      %p141 = scmp.eq.s32.totalorder %s25, 1
      %p142 = por %p140, %p141
      %p143 = scmp.ne.s32.totalorder %s132, %s133
      %p144 = scmp.eq.s32.totalorder %s25, 0
      %p145 = por %p143, %p144
      %p146 = scmp.ne.s32.totalorder %s132, %s133
      %p147 = scmp.eq.s32.totalorder %s26, 1
      %p148 = por %p146, %p147
      %p150 = scmp.ne.s32.totalorder %s133, %s149
      %p151 = scmp.eq.s32.totalorder %s26, 0
      %p152 = por %p150, %p151
      %p153 = scmp.le.s32.totalorder 1, %s20
      %p154 = scmp.lt.s32.totalorder %s20, 3
      %p155 = pnand %p153, %p154
      %p156 = pneg %p155
      // Predicated region
      $region9: #{tpu_custom_call.1} parent=5 // pred_check
        _
      $region10: #{tpu_custom_call.1} parent=5 // pred_check_branch
        %158 = sbr.rel (%p155) target = $region12
      $region11: #{tpu_custom_call.1} parent=5 // pred_region
        %s159 = ssub.s32 %s20, 1
        // Predicated region
        $region13: #{tpu_custom_call.1} parent=11 // pred_check
          %p160 = pneg %p119
        $region14: #{tpu_custom_call.1} parent=11 // pred_check_branch
          %162 = sbr.rel (%p160) target = $region16
        $region15: #{tpu_custom_call.1} parent=11 // pred_region
          %s164 = ssub.s32 2048, 2048
          %165 = vsyncadd [#allocation9], %s164
          %s166 = sshll.u32 [#allocation8], 4
          %s167 = int_to_ptr.vmem [resolvable:$true] %s166
          %172 = dma.hbm_to_vmem [thread:$0]  %s3, 2048, %s167, [#allocation9], 128, 128, 8
        $region16: #{tpu_custom_call.1} parent=11 // pred_fallthru
          _
      $region12: #{tpu_custom_call.1} parent=5 // pred_fallthru
        _
      %p173 = scmp.lt.s32.totalorder %s20, 2
      // Predicated region
      $region17: #{tpu_custom_call.1} parent=5 // pred_check
        %p174 = pneg %p173
      $region18: #{tpu_custom_call.1} parent=5 // pred_check_branch
        %176 = sbr.rel (%p174) target = $region20
      $region19: #{tpu_custom_call.1} parent=5 // pred_region
        // Predicated region
        $region21: #{tpu_custom_call.1} parent=19 // pred_check
          %p177 = pneg %p40
        $region22: #{tpu_custom_call.1} parent=19 // pred_check_branch
          %179 = sbr.rel (%p177) target = $region24
        $region23: #{tpu_custom_call.1} parent=19 // pred_region
          %s180 = sand.u32 %s30, 1
          %s181 = scalar_lea.sflag [#allocation3], %s180
          %s182 = sand.u32 %s30, 1
          %s183 = smul.addr %s182, 32
          %s184 = scalar_lea.vmem [#allocation2], %s183
          %s185 = smul.u32 2, %s20
          %s187 = ssub.s32 512, 512
          %188 = vsyncadd %s181, %s187
          %s189 = smul.addr %s185, 2
          %s190 = smul.addr %s189, 128
          %s191 = scalar_lea.hbm %s0, %s190
          %s192 = sshll.u32 %s184, 4
          %s193 = int_to_ptr.vmem [resolvable:$true] %s192
          %198 = dma.hbm_to_vmem [thread:$0]  %s191, 512, %s193, %s181, 128, 128, 8
        $region24: #{tpu_custom_call.1} parent=19 // pred_fallthru
          _
        // Predicated region
        $region25: #{tpu_custom_call.1} parent=19 // pred_check
          %p199 = pneg %p66
        $region26: #{tpu_custom_call.1} parent=19 // pred_check_branch
          %201 = sbr.rel (%p199) target = $region28
        $region27: #{tpu_custom_call.1} parent=19 // pred_region
          %s202 = sand.u32 %s20, 1
          %s203 = scalar_lea.sflag [#allocation6], %s202
          %s204 = sand.u32 %s56, 1
          %s205 = smul.addr %s204, 32
          %s206 = scalar_lea.vmem [#allocation5], %s205
          %s207 = smul.u32 2, %s20
          %s209 = ssub.s32 512, 512
          %210 = vsyncadd %s203, %s209
          %s211 = smul.addr %s207, 2
          %s212 = smul.addr %s211, 128
          %s213 = scalar_lea.hbm %s1, %s212
          %s214 = sshll.u32 %s206, 4
          %s215 = int_to_ptr.vmem [resolvable:$true] %s214
          %220 = dma.hbm_to_vmem [thread:$0]  %s213, 512, %s215, %s203, 128, 128, 8
        $region28: #{tpu_custom_call.1} parent=19 // pred_fallthru
          _
        // Predicated region
        $region29: #{tpu_custom_call.1} parent=19 // pred_check
          %p221 = pneg %p92
        $region30: #{tpu_custom_call.1} parent=19 // pred_check_branch
          %223 = sbr.rel (%p221) target = $region32
        $region31: #{tpu_custom_call.1} parent=19 // pred_region
          %s224 = sand.u32 %s20, 1
          %s225 = scalar_lea.sflag [#allocation6], %s224
          %s226 = sand.u32 %s82, 1
          %s227 = smul.addr %s226, 32
          %s228 = scalar_lea.vmem [#allocation7], %s227
          %s229 = smul.u32 2, %s20
          %s231 = ssub.s32 512, 512
          %232 = vsyncadd %s225, %s231
          %s233 = smul.addr %s229, 2
          %s234 = smul.addr %s233, 128
          %s235 = scalar_lea.hbm %s2, %s234
          %s236 = sshll.u32 %s228, 4
          %s237 = int_to_ptr.vmem [resolvable:$true] %s236
          %242 = dma.hbm_to_vmem [thread:$0]  %s235, 512, %s237, %s225, 128, 128, 8
        $region32: #{tpu_custom_call.1} parent=19 // pred_fallthru
          _
      $region20: #{tpu_custom_call.1} parent=5 // pred_fallthru
        _
      %p243 = scmp.le.s32.totalorder 1, %s20
      %p244 = scmp.lt.s32.totalorder %s20, 3
      %p245 = pnand %p243, %p244
      %p246 = pneg %p245
      // Predicated region
      $region33: #{tpu_custom_call.1} parent=5 // pred_check
        _
      $region34: #{tpu_custom_call.1} parent=5 // pred_check_branch
        %248 = sbr.rel (%p245) target = $region36
      $region35: #{tpu_custom_call.1} parent=5 // pred_region
        %s249 = ssub.s32 %s20, 1
        %s250 = sand.u32 %s33, 1
        %s251 = scalar_lea.sflag [#allocation3], %s250
        %s252 = sand.u32 %s33, 1
        %s253 = smul.addr %s252, 32
        %s254 = scalar_lea.vmem [#allocation2], %s253
        // Predicated region
        $region37: #{tpu_custom_call.1} parent=35 // pred_check
          %p255 = pneg %p46
        $region38: #{tpu_custom_call.1} parent=35 // pred_check_branch
          %257 = sbr.rel (%p255) target = $region40
        $region39: #{tpu_custom_call.1} parent=35 // pred_region
          %258 = dma.done %s251, 512
        $region40: #{tpu_custom_call.1} parent=35 // pred_fallthru
          _
        %s259 = sand.u32 %s25, 1
        %s260 = scalar_lea.sflag [#allocation6], %s259
        %s261 = sand.u32 %s59, 1
        %s262 = smul.addr %s261, 32
        %s263 = scalar_lea.vmem [#allocation5], %s262
        // Predicated region
        $region41: #{tpu_custom_call.1} parent=35 // pred_check
          %p264 = pneg %p72
        $region42: #{tpu_custom_call.1} parent=35 // pred_check_branch
          %266 = sbr.rel (%p264) target = $region44
        $region43: #{tpu_custom_call.1} parent=35 // pred_region
          %267 = dma.done %s260, 512
        $region44: #{tpu_custom_call.1} parent=35 // pred_fallthru
          _
        %s268 = sand.u32 %s25, 1
        %s269 = scalar_lea.sflag [#allocation6], %s268
        %s270 = sand.u32 %s85, 1
        %s271 = smul.addr %s270, 32
        %s272 = scalar_lea.vmem [#allocation7], %s271
        // Predicated region
        $region45: #{tpu_custom_call.1} parent=35 // pred_check
          %p273 = pneg %p98
        $region46: #{tpu_custom_call.1} parent=35 // pred_check_branch
          %275 = sbr.rel (%p273) target = $region48
        $region47: #{tpu_custom_call.1} parent=35 // pred_region
          %276 = dma.done %s269, 512
        $region48: #{tpu_custom_call.1} parent=35 // pred_fallthru
          _
        // Predicated region
        $region49: #{tpu_custom_call.1} parent=35 // pred_check
          %p277 = pneg %p119
        $region50: #{tpu_custom_call.1} parent=35 // pred_check_branch
          %279 = sbr.rel (%p277) target = $region52
        $region51: #{tpu_custom_call.1} parent=35 // pred_region
          %280 = dma.done [#allocation9], 2048
        $region52: #{tpu_custom_call.1} parent=35 // pred_fallthru
          _
        %s281 = sand.u32 %s33, 1
        %s282 = scalar_lea.sflag [#allocation3], %s281
        %s283 = sand.u32 %s33, 1
        %s284 = smul.addr %s283, 32
        %s285 = scalar_lea.vmem [#allocation2], %s284
        %p286 = pneg %p46
        %p287 = pneg %p43
        %s288 = sand.u32 %s25, 1
        %s289 = scalar_lea.sflag [#allocation6], %s288
        %s290 = sand.u32 %s59, 1
        %s291 = smul.addr %s290, 32
        %s292 = scalar_lea.vmem [#allocation5], %s291
        %p293 = pneg %p72
        %p294 = pneg %p69
        %s295 = sand.u32 %s25, 1
        %s296 = scalar_lea.sflag [#allocation6], %s295
        %s297 = sand.u32 %s85, 1
        %s298 = smul.addr %s297, 32
        %s299 = scalar_lea.vmem [#allocation7], %s298
        %p300 = pneg %p98
        %p301 = pneg %p95
        %p302 = pneg %p119
        %p303 = pneg %p116
        %p304 = pneg %p145
        %p305 = pneg %p142
        %s306 = sand.u32 %s132, 1
        %s307 = scalar_lea.sflag [#allocation4], %s306
        %s308 = sand.u32 %s132, 1
        %s309 = smul.addr %s308, 32
        %s310 = scalar_lea.vmem [#allocation10], %s309
        %s311 = smul.u32 2, %s25
        %s312 = smul.u32 2, %s25
        %s313 = smul.u32 2, %s25
        %s314 = smul.u32 2, %s25
        %v315 = vld [vmem:[%s254] sm:$0xff]
        %v316 = vld [vmem:[%s254 + $0x8] sm:$0xff]
        %v317 = vld [vmem:[%s254 + $0x10] sm:$0xff]
        %v318 = vld [vmem:[%s254 + $0x18] sm:$0xff]
        %v319 = vmul.f32 %v315, 0.35355338
        %v320 = vmul.f32 %v316, 0.35355338
        %v321 = vmul.f32 %v317, 0.35355338
        %v322 = vmul.f32 %v318, 0.35355338
        %v323 = vld [vmem:[%s263] sm:$0xff]
        %v324 = vld [vmem:[%s263 + $0x8] sm:$0xff]
        %v325 = vld [vmem:[%s263 + $0x10] sm:$0xff]
        %v326 = vld [vmem:[%s263 + $0x18] sm:$0xff]
        %v327 = vld [vmem:[%s272] sm:$0xff]
        %v328 = vld [vmem:[%s272 + $0x8] sm:$0xff]
        %v329 = vld [vmem:[%s272 + $0x10] sm:$0xff]
        %v330 = vld [vmem:[%s272 + $0x18] sm:$0xff]
        %vm331 = vcmask 64512
        %v333 = vsel %vm331, %v319, 0
        %v336 = vsel %vm331, %v320, 0
        %v339 = vsel %vm331, %v323, 0
        %v342 = vsel %vm331, %v324, 0
        %344 = vmatprep.subr.mxu0 0.0
        %345 = vmatpush1.xpose.msra.mxu0 %v339
        %346 = vmatprep.subr.mxu0 0.0
        %347 = vmatpush1.xpose.msra.mxu0 %v342
        %348 = vmatprep.subr.mxu0 0.0
        %349 = vmatpush1.xpose.msra.mxu0 0.0
        %350 = vmatprep.subr.mxu0 0.0
        %351 = vmatpush1.xpose.msra.mxu0 0.0
        %352 = vmatprep.subr.mxu0 0.0
        %353 = vmatpush1.xpose.msra.mxu0 0.0
        %354 = vmatprep.subr.mxu0 0.0
        %355 = vmatpush1.xpose.msra.mxu0 0.0
        %356 = vmatprep.subr.mxu0 0.0
        %357 = vmatpush1.xpose.msra.mxu0 0.0
        %358 = vmatprep.subr.mxu0 0.0
        %359 = vmatpush1.xpose.msra.mxu0 0.0
        %360 = vmatprep.subr.mxu0 0.0
        %361 = vmatpush1.xpose.msra.mxu0 0.0
        %362 = vmatprep.subr.mxu0 0.0
        %363 = vmatpush1.xpose.msra.mxu0 0.0
        %364 = vmatprep.subr.mxu0 0.0
        %365 = vmatpush1.xpose.msra.mxu0 0.0
        %366 = vmatprep.subr.mxu0 0.0
        %367 = vmatpush1.xpose.msra.mxu0 0.0
        %368 = vmatprep.subr.mxu0 0.0
        %369 = vmatpush1.xpose.msra.mxu0 0.0
        %370 = vmatprep.subr.mxu0 0.0
        %371 = vmatpush1.xpose.msra.mxu0 0.0
        %372 = vmatprep.subr.mxu0 0.0
        %373 = vmatpush1.xpose.msra.mxu0 0.0
        %374 = vmatprep.subr.mxu0 0.0
        %375 = vmatpush1.xpose.msra.mxu0 0.0
        %376 = vmatprep.subr.mxu0 0.0
        %377 = vmatpush1.xpose.msra.mxu0 0.0
        %378 = vmatprep.subr.mxu0 0.0
        %379 = vmatpush1.xpose.msra.mxu0 0.0
        %380 = vmatprep.subr.mxu0 0.0
        %381 = vmatpush1.xpose.msra.mxu0 0.0
        %382 = vmatprep.subr.mxu0 0.0
        %383 = vmatpush1.xpose.msra.mxu0 0.0
        %384 = vmatprep.subr.mxu0 0.0
        %385 = vmatpush1.xpose.msra.mxu0 0.0
        %386 = vmatprep.subr.mxu0 0.0
        %387 = vmatpush1.xpose.msra.mxu0 0.0
        %388 = vmatprep.subr.mxu0 0.0
        %389 = vmatpush1.xpose.msra.mxu0 0.0
        %390 = vmatprep.subr.mxu0 0.0
        %391 = vmatpush1.xpose.msra.mxu0 0.0
        %392 = vmatprep.subr.mxu0 0.0
        %393 = vmatpush1.xpose.msra.mxu0 0.0
        %394 = vmatprep.subr.mxu0 0.0
        %395 = vmatpush1.xpose.msra.mxu0 0.0
        %396 = vmatprep.subr.mxu0 0.0
        %397 = vmatpush1.xpose.msra.mxu0 0.0
        %398 = vmatprep.subr.mxu0 0.0
        %399 = vmatpush1.xpose.msra.mxu0 0.0
        %400 = vmatprep.subr.mxu0 0.0
        %401 = vmatpush1.xpose.msra.mxu0 0.0
        %402 = vmatprep.subr.mxu0 0.0
        %403 = vmatpush1.xpose.msra.mxu0 0.0
        %404 = vmatprep.subr.mxu0 0.0
        %405 = vmatpush1.xpose.msra.mxu0 0.0
        %406 = vmatprep.subr.mxu0 0.0
        %407 = vmatpush1.xpose.msra.mxu0 0.0
        %408 = vmatprep.mubr.f32.mxu0 0.0
        %409 = vmatmul.mubr.f32.gmra.mrb[0].mxu0 %v333
        %v410 = vpop.f32.mrb[0].mxu0
        %v411 = vadd.f32 0.0, %v410
        %v412 = vpop.f32.mrb[0].mxu0
        %413 = vmatprep.mubr.f32.mxu0 0.0
        %414 = vmatmul.mubr.f32.gmra.mrb[0].mxu0 %v336
        %v415 = vpop.f32.mrb[0].mxu0
        %v416 = vadd.f32 0.0, %v415
        %v417 = vpop.f32.mrb[0].mxu0
        %418 = vdwg.mxu0
        %v420 = vsel %vm331, %v321, 0
        %v423 = vsel %vm331, %v322, 0
        %v426 = vsel %vm331, %v325, 0
        %v429 = vsel %vm331, %v326, 0
        %431 = vmatprep.subr.mxu0 0.0
        %432 = vmatpush1.xpose.msra.mxu0 %v426
        %433 = vmatprep.subr.mxu0 0.0
        %434 = vmatpush1.xpose.msra.mxu0 %v429
        %435 = vmatprep.subr.mxu0 0.0
        %436 = vmatpush1.xpose.msra.mxu0 0.0
        %437 = vmatprep.subr.mxu0 0.0
        %438 = vmatpush1.xpose.msra.mxu0 0.0
        %439 = vmatprep.subr.mxu0 0.0
        %440 = vmatpush1.xpose.msra.mxu0 0.0
        %441 = vmatprep.subr.mxu0 0.0
        %442 = vmatpush1.xpose.msra.mxu0 0.0
        %443 = vmatprep.subr.mxu0 0.0
        %444 = vmatpush1.xpose.msra.mxu0 0.0
        %445 = vmatprep.subr.mxu0 0.0
        %446 = vmatpush1.xpose.msra.mxu0 0.0
        %447 = vmatprep.subr.mxu0 0.0
        %448 = vmatpush1.xpose.msra.mxu0 0.0
        %449 = vmatprep.subr.mxu0 0.0
        %450 = vmatpush1.xpose.msra.mxu0 0.0
        %451 = vmatprep.subr.mxu0 0.0
        %452 = vmatpush1.xpose.msra.mxu0 0.0
        %453 = vmatprep.subr.mxu0 0.0
        %454 = vmatpush1.xpose.msra.mxu0 0.0
        %455 = vmatprep.subr.mxu0 0.0
        %456 = vmatpush1.xpose.msra.mxu0 0.0
        %457 = vmatprep.subr.mxu0 0.0
        %458 = vmatpush1.xpose.msra.mxu0 0.0
        %459 = vmatprep.subr.mxu0 0.0
        %460 = vmatpush1.xpose.msra.mxu0 0.0
        %461 = vmatprep.subr.mxu0 0.0
        %462 = vmatpush1.xpose.msra.mxu0 0.0
        %463 = vmatprep.subr.mxu0 0.0
        %464 = vmatpush1.xpose.msra.mxu0 0.0
        %465 = vmatprep.subr.mxu0 0.0
        %466 = vmatpush1.xpose.msra.mxu0 0.0
        %467 = vmatprep.subr.mxu0 0.0
        %468 = vmatpush1.xpose.msra.mxu0 0.0
        %469 = vmatprep.subr.mxu0 0.0
        %470 = vmatpush1.xpose.msra.mxu0 0.0
        %471 = vmatprep.subr.mxu0 0.0
        %472 = vmatpush1.xpose.msra.mxu0 0.0
        %473 = vmatprep.subr.mxu0 0.0
        %474 = vmatpush1.xpose.msra.mxu0 0.0
        %475 = vmatprep.subr.mxu0 0.0
        %476 = vmatpush1.xpose.msra.mxu0 0.0
        %477 = vmatprep.subr.mxu0 0.0
        %478 = vmatpush1.xpose.msra.mxu0 0.0
        %479 = vmatprep.subr.mxu0 0.0
        %480 = vmatpush1.xpose.msra.mxu0 0.0
        %481 = vmatprep.subr.mxu0 0.0
        %482 = vmatpush1.xpose.msra.mxu0 0.0
        %483 = vmatprep.subr.mxu0 0.0
        %484 = vmatpush1.xpose.msra.mxu0 0.0
        %485 = vmatprep.subr.mxu0 0.0
        %486 = vmatpush1.xpose.msra.mxu0 0.0
        %487 = vmatprep.subr.mxu0 0.0
        %488 = vmatpush1.xpose.msra.mxu0 0.0
        %489 = vmatprep.subr.mxu0 0.0
        %490 = vmatpush1.xpose.msra.mxu0 0.0
        %491 = vmatprep.subr.mxu0 0.0
        %492 = vmatpush1.xpose.msra.mxu0 0.0
        %493 = vmatprep.subr.mxu0 0.0
        %494 = vmatpush1.xpose.msra.mxu0 0.0
        %495 = vmatprep.mubr.f32.mxu0 0.0
        %496 = vmatmul.mubr.f32.gmra.mrb[0].mxu0 %v420
        %v497 = vpop.f32.mrb[0].mxu0
        %v498 = vadd.f32 0.0, %v497
        %v499 = vpop.f32.mrb[0].mxu0
        %500 = vmatprep.mubr.f32.mxu0 0.0
        %501 = vmatmul.mubr.f32.gmra.mrb[0].mxu0 %v423
        %v502 = vpop.f32.mrb[0].mxu0
        %v503 = vadd.f32 0.0, %v502
        %v504 = vpop.f32.mrb[0].mxu0
        %505 = vdwg.mxu0
        %v506 = vld [vmem:[#allocation8] sm:$0xff]
        %v507 = vld [vmem:[#allocation8 + $0x8] sm:$0xff]
        %v508 = vld [vmem:[#allocation8 + $0x10] sm:$0xff]
        %v509 = vld [vmem:[#allocation8 + $0x18] sm:$0xff]
        %v510 = vadd.f32 %v411, %v506
        %v511 = vadd.f32 %v416, %v507
        %v512 = vadd.f32 %v498, %v508
        %v513 = vadd.f32 %v503, %v509
        %vm514 = vcmask 130048
        %v515 = vsel %vm514, %v510, -inf
        %516 = vmax.xlane.f32.xlu0 %v515
        %v517 = vpop.xlane.xlu0 %516
        %v518 = vsel %vm514, %v511, -inf
        %519 = vmax.xlane.f32.xlu0 %v518
        %v520 = vpop.xlane.xlu0 %519
        %v521 = vsel %vm514, %v512, -inf
        %522 = vmax.xlane.f32.xlu0 %v521
        %v523 = vpop.xlane.xlu0 %522
        %v524 = vsel %vm514, %v513, -inf
        %525 = vmax.xlane.f32.xlu0 %v524
        %v526 = vpop.xlane.xlu0 %525
        %v527 = vsub.f32 %v510, %v517
        %v528 = vsub.f32 %v511, %v520
        %v529 = vsub.f32 %v512, %v523
        %v530 = vsub.f32 %v513, %v526
        %v531 = vmul.f32 %v527, 1.442695
        %v532 = vpow.pop %v531
        %v533 = vmul.f32 %v528, 1.442695
        %v534 = vpow.pop %v533
        %v535 = vmul.f32 %v529, 1.442695
        %v536 = vpow.pop %v535
        %v537 = vmul.f32 %v530, 1.442695
        %v538 = vpow.pop %v537
        %v539 = vsel %vm514, %v532, 0.0
        %540 = vadd.xlane.f32.xlu0 %v539
        %v541 = vpop.xlane.xlu0 %540
        %v542 = vsel %vm514, %v534, 0.0
        %543 = vadd.xlane.f32.xlu0 %v542
        %v544 = vpop.xlane.xlu0 %543
        %v545 = vsel %vm514, %v536, 0.0
        %546 = vadd.xlane.f32.xlu0 %v545
        %v547 = vpop.xlane.xlu0 %546
        %v548 = vsel %vm514, %v538, 0.0
        %549 = vadd.xlane.f32.xlu0 %v548
        %v550 = vpop.xlane.xlu0 %549
        %v552 = vsel %vm514, %v532, 0
        %v555 = vsel %vm514, %v534, 0
        %557 = vmatprep.subr.mxu0 0.0
        %558 = vmatpush1.msra.mxu0 %v327
        %559 = vmatprep.subr.mxu0 0.0
        %560 = vmatpush1.msra.mxu0 %v328
        %561 = vmatprep.subr.mxu0 0.0
        %562 = vmatpush1.msra.mxu0 0.0
        %563 = vmatprep.subr.mxu0 0.0
        %564 = vmatpush1.msra.mxu0 0.0
        %565 = vmatprep.subr.mxu0 0.0
        %566 = vmatpush1.msra.mxu0 0.0
        %567 = vmatprep.subr.mxu0 0.0
        %568 = vmatpush1.msra.mxu0 0.0
        %569 = vmatprep.subr.mxu0 0.0
        %570 = vmatpush1.msra.mxu0 0.0
        %571 = vmatprep.subr.mxu0 0.0
        %572 = vmatpush1.msra.mxu0 0.0
        %573 = vmatprep.subr.mxu0 0.0
        %574 = vmatpush1.msra.mxu0 0.0
        %575 = vmatprep.subr.mxu0 0.0
        %576 = vmatpush1.msra.mxu0 0.0
        %577 = vmatprep.subr.mxu0 0.0
        %578 = vmatpush1.msra.mxu0 0.0
        %579 = vmatprep.subr.mxu0 0.0
        %580 = vmatpush1.msra.mxu0 0.0
        %581 = vmatprep.subr.mxu0 0.0
        %582 = vmatpush1.msra.mxu0 0.0
        %583 = vmatprep.subr.mxu0 0.0
        %584 = vmatpush1.msra.mxu0 0.0
        %585 = vmatprep.subr.mxu0 0.0
        %586 = vmatpush1.msra.mxu0 0.0
        %587 = vmatprep.subr.mxu0 0.0
        %588 = vmatpush1.msra.mxu0 0.0
        %589 = vmatprep.subr.mxu0 0.0
        %590 = vmatpush1.msra.mxu0 0.0
        %591 = vmatprep.subr.mxu0 0.0
        %592 = vmatpush1.msra.mxu0 0.0
        %593 = vmatprep.subr.mxu0 0.0
        %594 = vmatpush1.msra.mxu0 0.0
        %595 = vmatprep.subr.mxu0 0.0
        %596 = vmatpush1.msra.mxu0 0.0
        %597 = vmatprep.subr.mxu0 0.0
        %598 = vmatpush1.msra.mxu0 0.0
        %599 = vmatprep.subr.mxu0 0.0
        %600 = vmatpush1.msra.mxu0 0.0
        %601 = vmatprep.subr.mxu0 0.0
        %602 = vmatpush1.msra.mxu0 0.0
        %603 = vmatprep.subr.mxu0 0.0
        %604 = vmatpush1.msra.mxu0 0.0
        %605 = vmatprep.subr.mxu0 0.0
        %606 = vmatpush1.msra.mxu0 0.0
        %607 = vmatprep.subr.mxu0 0.0
        %608 = vmatpush1.msra.mxu0 0.0
        %609 = vmatprep.subr.mxu0 0.0
        %610 = vmatpush1.msra.mxu0 0.0
        %611 = vmatprep.subr.mxu0 0.0
        %612 = vmatpush1.msra.mxu0 0.0
        %613 = vmatprep.subr.mxu0 0.0
        %614 = vmatpush1.msra.mxu0 0.0
        %615 = vmatprep.subr.mxu0 0.0
        %616 = vmatpush1.msra.mxu0 0.0
        %617 = vmatprep.subr.mxu0 0.0
        %618 = vmatpush1.msra.mxu0 0.0
        %619 = vmatprep.subr.mxu0 0.0
        %620 = vmatpush1.msra.mxu0 0.0
        %621 = vmatprep.mubr.f32.mxu0 0.0
        %622 = vmatmul.mubr.f32.gmra.mrb[0].mxu0 %v552
        %v623 = vpop.f32.mrb[0].mxu0
        %v624 = vadd.f32 0.0, %v623
        %v625 = vpop.f32.mrb[0].mxu0
        %626 = vmatprep.mubr.f32.mxu0 0.0
        %627 = vmatmul.mubr.f32.gmra.mrb[0].mxu0 %v555
        %v628 = vpop.f32.mrb[0].mxu0
        %v629 = vadd.f32 0.0, %v628
        %v630 = vpop.f32.mrb[0].mxu0
        %631 = vdwg.mxu0
        %v633 = vsel %vm514, %v536, 0
        %v636 = vsel %vm514, %v538, 0
        %638 = vmatprep.subr.mxu0 0.0
        %639 = vmatpush1.msra.mxu0 %v329
        %640 = vmatprep.subr.mxu0 0.0
        %641 = vmatpush1.msra.mxu0 %v330
        %642 = vmatprep.subr.mxu0 0.0
        %643 = vmatpush1.msra.mxu0 0.0
        %644 = vmatprep.subr.mxu0 0.0
        %645 = vmatpush1.msra.mxu0 0.0
        %646 = vmatprep.subr.mxu0 0.0
        %647 = vmatpush1.msra.mxu0 0.0
        %648 = vmatprep.subr.mxu0 0.0
        %649 = vmatpush1.msra.mxu0 0.0
        %650 = vmatprep.subr.mxu0 0.0
        %651 = vmatpush1.msra.mxu0 0.0
        %652 = vmatprep.subr.mxu0 0.0
        %653 = vmatpush1.msra.mxu0 0.0
        %654 = vmatprep.subr.mxu0 0.0
        %655 = vmatpush1.msra.mxu0 0.0
        %656 = vmatprep.subr.mxu0 0.0
        %657 = vmatpush1.msra.mxu0 0.0
        %658 = vmatprep.subr.mxu0 0.0
        %659 = vmatpush1.msra.mxu0 0.0
        %660 = vmatprep.subr.mxu0 0.0
        %661 = vmatpush1.msra.mxu0 0.0
        %662 = vmatprep.subr.mxu0 0.0
        %663 = vmatpush1.msra.mxu0 0.0
        %664 = vmatprep.subr.mxu0 0.0
        %665 = vmatpush1.msra.mxu0 0.0
        %666 = vmatprep.subr.mxu0 0.0
        %667 = vmatpush1.msra.mxu0 0.0
        %668 = vmatprep.subr.mxu0 0.0
        %669 = vmatpush1.msra.mxu0 0.0
        %670 = vmatprep.subr.mxu0 0.0
        %671 = vmatpush1.msra.mxu0 0.0
        %672 = vmatprep.subr.mxu0 0.0
        %673 = vmatpush1.msra.mxu0 0.0
        %674 = vmatprep.subr.mxu0 0.0
        %675 = vmatpush1.msra.mxu0 0.0
        %676 = vmatprep.subr.mxu0 0.0
        %677 = vmatpush1.msra.mxu0 0.0
        %678 = vmatprep.subr.mxu0 0.0
        %679 = vmatpush1.msra.mxu0 0.0
        %680 = vmatprep.subr.mxu0 0.0
        %681 = vmatpush1.msra.mxu0 0.0
        %682 = vmatprep.subr.mxu0 0.0
        %683 = vmatpush1.msra.mxu0 0.0
        %684 = vmatprep.subr.mxu0 0.0
        %685 = vmatpush1.msra.mxu0 0.0
        %686 = vmatprep.subr.mxu0 0.0
        %687 = vmatpush1.msra.mxu0 0.0
        %688 = vmatprep.subr.mxu0 0.0
        %689 = vmatpush1.msra.mxu0 0.0
        %690 = vmatprep.subr.mxu0 0.0
        %691 = vmatpush1.msra.mxu0 0.0
        %692 = vmatprep.subr.mxu0 0.0
        %693 = vmatpush1.msra.mxu0 0.0
        %694 = vmatprep.subr.mxu0 0.0
        %695 = vmatpush1.msra.mxu0 0.0
        %696 = vmatprep.subr.mxu0 0.0
        %697 = vmatpush1.msra.mxu0 0.0
        %698 = vmatprep.subr.mxu0 0.0
        %699 = vmatpush1.msra.mxu0 0.0
        %700 = vmatprep.subr.mxu0 0.0
        %701 = vmatpush1.msra.mxu0 0.0
        %702 = vmatprep.mubr.f32.mxu0 0.0
        %703 = vmatmul.mubr.f32.gmra.mrb[0].mxu0 %v633
        %v704 = vpop.f32.mrb[0].mxu0
        %v705 = vadd.f32 0.0, %v704
        %v706 = vpop.f32.mrb[0].mxu0
        %707 = vmatprep.mubr.f32.mxu0 0.0
        %708 = vmatmul.mubr.f32.gmra.mrb[0].mxu0 %v636
        %v709 = vpop.f32.mrb[0].mxu0
        %v710 = vadd.f32 0.0, %v709
        %v711 = vpop.f32.mrb[0].mxu0
        %712 = vdwg.mxu0
        %v713 = vrcp.pop %v541
        %v714 = vmul.f32 %v624, %v713
        %v715 = vrcp.pop %v544
        %v716 = vmul.f32 %v629, %v715
        %v717 = vrcp.pop %v547
        %v718 = vmul.f32 %v705, %v717
        %v719 = vrcp.pop %v550
        %v720 = vmul.f32 %v710, %v719
        %v721 = vld [vmem:[%s254] sm:$0xff]
        %v722 = vld [vmem:[%s254 + $0x8] sm:$0xff]
        %v723 = vld [vmem:[%s254 + $0x10] sm:$0xff]
        %v724 = vld [vmem:[%s254 + $0x18] sm:$0xff]
        %v725 = vmul.f32 %v721, 0.35355338
        %v726 = vmul.f32 %v722, 0.35355338
        %v727 = vmul.f32 %v723, 0.35355338
        %v728 = vmul.f32 %v724, 0.35355338
        %v729 = vld [vmem:[%s263] sm:$0xff]
        %v730 = vld [vmem:[%s263 + $0x8] sm:$0xff]
        %v731 = vld [vmem:[%s263 + $0x10] sm:$0xff]
        %v732 = vld [vmem:[%s263 + $0x18] sm:$0xff]
        %v733 = vld [vmem:[%s272] sm:$0xff]
        %v734 = vld [vmem:[%s272 + $0x8] sm:$0xff]
        %v735 = vld [vmem:[%s272 + $0x10] sm:$0xff]
        %v736 = vld [vmem:[%s272 + $0x18] sm:$0xff]
        %739 = vrot.lane.b32.xlu0 %v725, 120
        %v740 = vpop.permute.xlu0 %739
        %741 = vrot.lane.b32.xlu0 %v726, 120
        %v742 = vpop.permute.xlu0 %741
        %745 = vrot.lane.b32.xlu0 %v729, 120
        %v746 = vpop.permute.xlu0 %745
        %747 = vrot.lane.b32.xlu0 %v730, 120
        %v748 = vpop.permute.xlu0 %747
        %v749 = vsel %vm331, %v740, 0
        %v751 = vsel %vm331, %v742, 0
        %v753 = vsel %vm331, %v746, 0
        %v755 = vsel %vm331, %v748, 0
        %757 = vmatprep.subr.mxu0 0.0
        %758 = vmatpush1.xpose.msra.mxu0 %v753
        %759 = vmatprep.subr.mxu0 0.0
        %760 = vmatpush1.xpose.msra.mxu0 %v755
        %761 = vmatprep.subr.mxu0 0.0
        %762 = vmatpush1.xpose.msra.mxu0 0.0
        %763 = vmatprep.subr.mxu0 0.0
        %764 = vmatpush1.xpose.msra.mxu0 0.0
        %765 = vmatprep.subr.mxu0 0.0
        %766 = vmatpush1.xpose.msra.mxu0 0.0
        %767 = vmatprep.subr.mxu0 0.0
        %768 = vmatpush1.xpose.msra.mxu0 0.0
        %769 = vmatprep.subr.mxu0 0.0
        %770 = vmatpush1.xpose.msra.mxu0 0.0
        %771 = vmatprep.subr.mxu0 0.0
        %772 = vmatpush1.xpose.msra.mxu0 0.0
        %773 = vmatprep.subr.mxu0 0.0
        %774 = vmatpush1.xpose.msra.mxu0 0.0
        %775 = vmatprep.subr.mxu0 0.0
        %776 = vmatpush1.xpose.msra.mxu0 0.0
        %777 = vmatprep.subr.mxu0 0.0
        %778 = vmatpush1.xpose.msra.mxu0 0.0
        %779 = vmatprep.subr.mxu0 0.0
        %780 = vmatpush1.xpose.msra.mxu0 0.0
        %781 = vmatprep.subr.mxu0 0.0
        %782 = vmatpush1.xpose.msra.mxu0 0.0
        %783 = vmatprep.subr.mxu0 0.0
        %784 = vmatpush1.xpose.msra.mxu0 0.0
        %785 = vmatprep.subr.mxu0 0.0
        %786 = vmatpush1.xpose.msra.mxu0 0.0
        %787 = vmatprep.subr.mxu0 0.0
        %788 = vmatpush1.xpose.msra.mxu0 0.0
        %789 = vmatprep.subr.mxu0 0.0
        %790 = vmatpush1.xpose.msra.mxu0 0.0
        %791 = vmatprep.subr.mxu0 0.0
        %792 = vmatpush1.xpose.msra.mxu0 0.0
        %793 = vmatprep.subr.mxu0 0.0
        %794 = vmatpush1.xpose.msra.mxu0 0.0
        %795 = vmatprep.subr.mxu0 0.0
        %796 = vmatpush1.xpose.msra.mxu0 0.0
        %797 = vmatprep.subr.mxu0 0.0
        %798 = vmatpush1.xpose.msra.mxu0 0.0
        %799 = vmatprep.subr.mxu0 0.0
        %800 = vmatpush1.xpose.msra.mxu0 0.0
        %801 = vmatprep.subr.mxu0 0.0
        %802 = vmatpush1.xpose.msra.mxu0 0.0
        %803 = vmatprep.subr.mxu0 0.0
        %804 = vmatpush1.xpose.msra.mxu0 0.0
        %805 = vmatprep.subr.mxu0 0.0
        %806 = vmatpush1.xpose.msra.mxu0 0.0
        %807 = vmatprep.subr.mxu0 0.0
        %808 = vmatpush1.xpose.msra.mxu0 0.0
        %809 = vmatprep.subr.mxu0 0.0
        %810 = vmatpush1.xpose.msra.mxu0 0.0
        %811 = vmatprep.subr.mxu0 0.0
        %812 = vmatpush1.xpose.msra.mxu0 0.0
        %813 = vmatprep.subr.mxu0 0.0
        %814 = vmatpush1.xpose.msra.mxu0 0.0
        %815 = vmatprep.subr.mxu0 0.0
        %816 = vmatpush1.xpose.msra.mxu0 0.0
        %817 = vmatprep.subr.mxu0 0.0
        %818 = vmatpush1.xpose.msra.mxu0 0.0
        %819 = vmatprep.subr.mxu0 0.0
        %820 = vmatpush1.xpose.msra.mxu0 0.0
        %821 = vmatprep.mubr.f32.mxu0 0.0
        %822 = vmatmul.mubr.f32.gmra.mrb[0].mxu0 %v749
        %v823 = vpop.f32.mrb[0].mxu0
        %v824 = vadd.f32 0.0, %v823
        %v825 = vpop.f32.mrb[0].mxu0
        %826 = vmatprep.mubr.f32.mxu0 0.0
        %827 = vmatmul.mubr.f32.gmra.mrb[0].mxu0 %v751
        %v828 = vpop.f32.mrb[0].mxu0
        %v829 = vadd.f32 0.0, %v828
        %v830 = vpop.f32.mrb[0].mxu0
        %831 = vdwg.mxu0
        %834 = vrot.lane.b32.xlu0 %v727, 120
        %v835 = vpop.permute.xlu0 %834
        %836 = vrot.lane.b32.xlu0 %v728, 120
        %v837 = vpop.permute.xlu0 %836
        %840 = vrot.lane.b32.xlu0 %v731, 120
        %v841 = vpop.permute.xlu0 %840
        %842 = vrot.lane.b32.xlu0 %v732, 120
        %v843 = vpop.permute.xlu0 %842
        %v844 = vsel %vm331, %v835, 0
        %v846 = vsel %vm331, %v837, 0
        %v848 = vsel %vm331, %v841, 0
        %v850 = vsel %vm331, %v843, 0
        %852 = vmatprep.subr.mxu0 0.0
        %853 = vmatpush1.xpose.msra.mxu0 %v848
        %854 = vmatprep.subr.mxu0 0.0
        %855 = vmatpush1.xpose.msra.mxu0 %v850
        %856 = vmatprep.subr.mxu0 0.0
        %857 = vmatpush1.xpose.msra.mxu0 0.0
        %858 = vmatprep.subr.mxu0 0.0
        %859 = vmatpush1.xpose.msra.mxu0 0.0
        %860 = vmatprep.subr.mxu0 0.0
        %861 = vmatpush1.xpose.msra.mxu0 0.0
        %862 = vmatprep.subr.mxu0 0.0
        %863 = vmatpush1.xpose.msra.mxu0 0.0
        %864 = vmatprep.subr.mxu0 0.0
        %865 = vmatpush1.xpose.msra.mxu0 0.0
        %866 = vmatprep.subr.mxu0 0.0
        %867 = vmatpush1.xpose.msra.mxu0 0.0
        %868 = vmatprep.subr.mxu0 0.0
        %869 = vmatpush1.xpose.msra.mxu0 0.0
        %870 = vmatprep.subr.mxu0 0.0
        %871 = vmatpush1.xpose.msra.mxu0 0.0
        %872 = vmatprep.subr.mxu0 0.0
        %873 = vmatpush1.xpose.msra.mxu0 0.0
        %874 = vmatprep.subr.mxu0 0.0
        %875 = vmatpush1.xpose.msra.mxu0 0.0
        %876 = vmatprep.subr.mxu0 0.0
        %877 = vmatpush1.xpose.msra.mxu0 0.0
        %878 = vmatprep.subr.mxu0 0.0
        %879 = vmatpush1.xpose.msra.mxu0 0.0
        %880 = vmatprep.subr.mxu0 0.0
        %881 = vmatpush1.xpose.msra.mxu0 0.0
        %882 = vmatprep.subr.mxu0 0.0
        %883 = vmatpush1.xpose.msra.mxu0 0.0
        %884 = vmatprep.subr.mxu0 0.0
        %885 = vmatpush1.xpose.msra.mxu0 0.0
        %886 = vmatprep.subr.mxu0 0.0
        %887 = vmatpush1.xpose.msra.mxu0 0.0
        %888 = vmatprep.subr.mxu0 0.0
        %889 = vmatpush1.xpose.msra.mxu0 0.0
        %890 = vmatprep.subr.mxu0 0.0
        %891 = vmatpush1.xpose.msra.mxu0 0.0
        %892 = vmatprep.subr.mxu0 0.0
        %893 = vmatpush1.xpose.msra.mxu0 0.0
        %894 = vmatprep.subr.mxu0 0.0
        %895 = vmatpush1.xpose.msra.mxu0 0.0
        %896 = vmatprep.subr.mxu0 0.0
        %897 = vmatpush1.xpose.msra.mxu0 0.0
        %898 = vmatprep.subr.mxu0 0.0
        %899 = vmatpush1.xpose.msra.mxu0 0.0
        %900 = vmatprep.subr.mxu0 0.0
        %901 = vmatpush1.xpose.msra.mxu0 0.0
        %902 = vmatprep.subr.mxu0 0.0
        %903 = vmatpush1.xpose.msra.mxu0 0.0
        %904 = vmatprep.subr.mxu0 0.0
        %905 = vmatpush1.xpose.msra.mxu0 0.0
        %906 = vmatprep.subr.mxu0 0.0
        %907 = vmatpush1.xpose.msra.mxu0 0.0
        %908 = vmatprep.subr.mxu0 0.0
        %909 = vmatpush1.xpose.msra.mxu0 0.0
        %910 = vmatprep.subr.mxu0 0.0
        %911 = vmatpush1.xpose.msra.mxu0 0.0
        %912 = vmatprep.subr.mxu0 0.0
        %913 = vmatpush1.xpose.msra.mxu0 0.0
        %914 = vmatprep.subr.mxu0 0.0
        %915 = vmatpush1.xpose.msra.mxu0 0.0
        %916 = vmatprep.mubr.f32.mxu0 0.0
        %917 = vmatmul.mubr.f32.gmra.mrb[0].mxu0 %v844
        %v918 = vpop.f32.mrb[0].mxu0
        %v919 = vadd.f32 0.0, %v918
        %v920 = vpop.f32.mrb[0].mxu0
        %921 = vmatprep.mubr.f32.mxu0 0.0
        %922 = vmatmul.mubr.f32.gmra.mrb[0].mxu0 %v846
        %v923 = vpop.f32.mrb[0].mxu0
        %v924 = vadd.f32 0.0, %v923
        %v925 = vpop.f32.mrb[0].mxu0
        %926 = vdwg.mxu0
        %s927 = scalar_lea.vmem [#allocation8], 32
        %v928 = vld [vmem:[%s927] sm:$0xff]
        %v929 = vld [vmem:[%s927 + $0x8] sm:$0xff]
        %v930 = vld [vmem:[%s927 + $0x10] sm:$0xff]
        %v931 = vld [vmem:[%s927 + $0x18] sm:$0xff]
        %v932 = vadd.f32 %v824, %v928
        %v933 = vadd.f32 %v829, %v929
        %v934 = vadd.f32 %v919, %v930
        %v935 = vadd.f32 %v924, %v931
        %v936 = vsel %vm514, %v932, -inf
        %937 = vmax.xlane.f32.xlu0 %v936
        %v938 = vpop.xlane.xlu0 %937
        %v939 = vsel %vm514, %v933, -inf
        %940 = vmax.xlane.f32.xlu0 %v939
        %v941 = vpop.xlane.xlu0 %940
        %v942 = vsel %vm514, %v934, -inf
        %943 = vmax.xlane.f32.xlu0 %v942
        %v944 = vpop.xlane.xlu0 %943
        %v945 = vsel %vm514, %v935, -inf
        %946 = vmax.xlane.f32.xlu0 %v945
        %v947 = vpop.xlane.xlu0 %946
        %v948 = vsub.f32 %v932, %v938
        %v949 = vsub.f32 %v933, %v941
        %v950 = vsub.f32 %v934, %v944
        %v951 = vsub.f32 %v935, %v947
        %v952 = vmul.f32 %v948, 1.442695
        %v953 = vpow.pop %v952
        %v954 = vmul.f32 %v949, 1.442695
        %v955 = vpow.pop %v954
        %v956 = vmul.f32 %v950, 1.442695
        %v957 = vpow.pop %v956
        %v958 = vmul.f32 %v951, 1.442695
        %v959 = vpow.pop %v958
        %v960 = vsel %vm514, %v953, 0.0
        %961 = vadd.xlane.f32.xlu0 %v960
        %v962 = vpop.xlane.xlu0 %961
        %v963 = vsel %vm514, %v955, 0.0
        %964 = vadd.xlane.f32.xlu0 %v963
        %v965 = vpop.xlane.xlu0 %964
        %v966 = vsel %vm514, %v957, 0.0
        %967 = vadd.xlane.f32.xlu0 %v966
        %v968 = vpop.xlane.xlu0 %967
        %v969 = vsel %vm514, %v959, 0.0
        %970 = vadd.xlane.f32.xlu0 %v969
        %v971 = vpop.xlane.xlu0 %970
        %974 = vrot.lane.b32.xlu0 %v733, 120
        %v975 = vpop.permute.xlu0 %974
        %976 = vrot.lane.b32.xlu0 %v734, 120
        %v977 = vpop.permute.xlu0 %976
        %v981 = vsel %vm514, %v953, 0
        %v984 = vsel %vm514, %v955, 0
        %986 = vmatprep.subr.mxu0 0.0
        %987 = vmatpush1.msra.mxu0 %v975
        %988 = vmatprep.subr.mxu0 0.0
        %989 = vmatpush1.msra.mxu0 %v977
        %990 = vmatprep.subr.mxu0 0.0
        %991 = vmatpush1.msra.mxu0 0.0
        %992 = vmatprep.subr.mxu0 0.0
        %993 = vmatpush1.msra.mxu0 0.0
        %994 = vmatprep.subr.mxu0 0.0
        %995 = vmatpush1.msra.mxu0 0.0
        %996 = vmatprep.subr.mxu0 0.0
        %997 = vmatpush1.msra.mxu0 0.0
        %998 = vmatprep.subr.mxu0 0.0
        %999 = vmatpush1.msra.mxu0 0.0
        %1000 = vmatprep.subr.mxu0 0.0
        %1001 = vmatpush1.msra.mxu0 0.0
        %1002 = vmatprep.subr.mxu0 0.0
        %1003 = vmatpush1.msra.mxu0 0.0
        %1004 = vmatprep.subr.mxu0 0.0
        %1005 = vmatpush1.msra.mxu0 0.0
        %1006 = vmatprep.subr.mxu0 0.0
        %1007 = vmatpush1.msra.mxu0 0.0
        %1008 = vmatprep.subr.mxu0 0.0
        %1009 = vmatpush1.msra.mxu0 0.0
        %1010 = vmatprep.subr.mxu0 0.0
        %1011 = vmatpush1.msra.mxu0 0.0
        %1012 = vmatprep.subr.mxu0 0.0
        %1013 = vmatpush1.msra.mxu0 0.0
        %1014 = vmatprep.subr.mxu0 0.0
        %1015 = vmatpush1.msra.mxu0 0.0
        %1016 = vmatprep.subr.mxu0 0.0
        %1017 = vmatpush1.msra.mxu0 0.0
        %1018 = vmatprep.subr.mxu0 0.0
        %1019 = vmatpush1.msra.mxu0 0.0
        %1020 = vmatprep.subr.mxu0 0.0
        %1021 = vmatpush1.msra.mxu0 0.0
        %1022 = vmatprep.subr.mxu0 0.0
        %1023 = vmatpush1.msra.mxu0 0.0
        %1024 = vmatprep.subr.mxu0 0.0
        %1025 = vmatpush1.msra.mxu0 0.0
        %1026 = vmatprep.subr.mxu0 0.0
        %1027 = vmatpush1.msra.mxu0 0.0
        %1028 = vmatprep.subr.mxu0 0.0
        %1029 = vmatpush1.msra.mxu0 0.0
        %1030 = vmatprep.subr.mxu0 0.0
        %1031 = vmatpush1.msra.mxu0 0.0
        %1032 = vmatprep.subr.mxu0 0.0
        %1033 = vmatpush1.msra.mxu0 0.0
        %1034 = vmatprep.subr.mxu0 0.0
        %1035 = vmatpush1.msra.mxu0 0.0
        %1036 = vmatprep.subr.mxu0 0.0
        %1037 = vmatpush1.msra.mxu0 0.0
        %1038 = vmatprep.subr.mxu0 0.0
        %1039 = vmatpush1.msra.mxu0 0.0
        %1040 = vmatprep.subr.mxu0 0.0
        %1041 = vmatpush1.msra.mxu0 0.0
        %1042 = vmatprep.subr.mxu0 0.0
        %1043 = vmatpush1.msra.mxu0 0.0
        %1044 = vmatprep.subr.mxu0 0.0
        %1045 = vmatpush1.msra.mxu0 0.0
        %1046 = vmatprep.subr.mxu0 0.0
        %1047 = vmatpush1.msra.mxu0 0.0
        %1048 = vmatprep.subr.mxu0 0.0
        %1049 = vmatpush1.msra.mxu0 0.0
        %1050 = vmatprep.mubr.f32.mxu0 0.0
        %1051 = vmatmul.mubr.f32.gmra.mrb[0].mxu0 %v981
        %v1052 = vpop.f32.mrb[0].mxu0
        %v1053 = vadd.f32 0.0, %v1052
        %v1054 = vpop.f32.mrb[0].mxu0
        %1055 = vmatprep.mubr.f32.mxu0 0.0
        %1056 = vmatmul.mubr.f32.gmra.mrb[0].mxu0 %v984
        %v1057 = vpop.f32.mrb[0].mxu0
        %v1058 = vadd.f32 0.0, %v1057
        %v1059 = vpop.f32.mrb[0].mxu0
        %1060 = vdwg.mxu0
        %1063 = vrot.lane.b32.xlu0 %v735, 120
        %v1064 = vpop.permute.xlu0 %1063
        %1065 = vrot.lane.b32.xlu0 %v736, 120
        %v1066 = vpop.permute.xlu0 %1065
        %v1070 = vsel %vm514, %v957, 0
        %v1073 = vsel %vm514, %v959, 0
        %1075 = vmatprep.subr.mxu0 0.0
        %1076 = vmatpush1.msra.mxu0 %v1064
        %1077 = vmatprep.subr.mxu0 0.0
        %1078 = vmatpush1.msra.mxu0 %v1066
        %1079 = vmatprep.subr.mxu0 0.0
        %1080 = vmatpush1.msra.mxu0 0.0
        %1081 = vmatprep.subr.mxu0 0.0
        %1082 = vmatpush1.msra.mxu0 0.0
        %1083 = vmatprep.subr.mxu0 0.0
        %1084 = vmatpush1.msra.mxu0 0.0
        %1085 = vmatprep.subr.mxu0 0.0
        %1086 = vmatpush1.msra.mxu0 0.0
        %1087 = vmatprep.subr.mxu0 0.0
        %1088 = vmatpush1.msra.mxu0 0.0
        %1089 = vmatprep.subr.mxu0 0.0
        %1090 = vmatpush1.msra.mxu0 0.0
        %1091 = vmatprep.subr.mxu0 0.0
        %1092 = vmatpush1.msra.mxu0 0.0
        %1093 = vmatprep.subr.mxu0 0.0
        %1094 = vmatpush1.msra.mxu0 0.0
        %1095 = vmatprep.subr.mxu0 0.0
        %1096 = vmatpush1.msra.mxu0 0.0
        %1097 = vmatprep.subr.mxu0 0.0
        %1098 = vmatpush1.msra.mxu0 0.0
        %1099 = vmatprep.subr.mxu0 0.0
        %1100 = vmatpush1.msra.mxu0 0.0
        %1101 = vmatprep.subr.mxu0 0.0
        %1102 = vmatpush1.msra.mxu0 0.0
        %1103 = vmatprep.subr.mxu0 0.0
        %1104 = vmatpush1.msra.mxu0 0.0
        %1105 = vmatprep.subr.mxu0 0.0
        %1106 = vmatpush1.msra.mxu0 0.0
        %1107 = vmatprep.subr.mxu0 0.0
        %1108 = vmatpush1.msra.mxu0 0.0
        %1109 = vmatprep.subr.mxu0 0.0
        %1110 = vmatpush1.msra.mxu0 0.0
        %1111 = vmatprep.subr.mxu0 0.0
        %1112 = vmatpush1.msra.mxu0 0.0
        %1113 = vmatprep.subr.mxu0 0.0
        %1114 = vmatpush1.msra.mxu0 0.0
        %1115 = vmatprep.subr.mxu0 0.0
        %1116 = vmatpush1.msra.mxu0 0.0
        %1117 = vmatprep.subr.mxu0 0.0
        %1118 = vmatpush1.msra.mxu0 0.0
        %1119 = vmatprep.subr.mxu0 0.0
        %1120 = vmatpush1.msra.mxu0 0.0
        %1121 = vmatprep.subr.mxu0 0.0
        %1122 = vmatpush1.msra.mxu0 0.0
        %1123 = vmatprep.subr.mxu0 0.0
        %1124 = vmatpush1.msra.mxu0 0.0
        %1125 = vmatprep.subr.mxu0 0.0
        %1126 = vmatpush1.msra.mxu0 0.0
        %1127 = vmatprep.subr.mxu0 0.0
        %1128 = vmatpush1.msra.mxu0 0.0
        %1129 = vmatprep.subr.mxu0 0.0
        %1130 = vmatpush1.msra.mxu0 0.0
        %1131 = vmatprep.subr.mxu0 0.0
        %1132 = vmatpush1.msra.mxu0 0.0
        %1133 = vmatprep.subr.mxu0 0.0
        %1134 = vmatpush1.msra.mxu0 0.0
        %1135 = vmatprep.subr.mxu0 0.0
        %1136 = vmatpush1.msra.mxu0 0.0
        %1137 = vmatprep.subr.mxu0 0.0
        %1138 = vmatpush1.msra.mxu0 0.0
        %1139 = vmatprep.mubr.f32.mxu0 0.0
        %1140 = vmatmul.mubr.f32.gmra.mrb[0].mxu0 %v1070
        %v1141 = vpop.f32.mrb[0].mxu0
        %v1142 = vadd.f32 0.0, %v1141
        %v1143 = vpop.f32.mrb[0].mxu0
        %1144 = vmatprep.mubr.f32.mxu0 0.0
        %1145 = vmatmul.mubr.f32.gmra.mrb[0].mxu0 %v1073
        %v1146 = vpop.f32.mrb[0].mxu0
        %v1147 = vadd.f32 0.0, %v1146
        %v1148 = vpop.f32.mrb[0].mxu0
        %1149 = vdwg.mxu0
        %v1150 = vrcp.pop %v962
        %v1151 = vmul.f32 %v1053, %v1150
        %v1152 = vrcp.pop %v965
        %v1153 = vmul.f32 %v1058, %v1152
        %v1154 = vrcp.pop %v968
        %v1155 = vmul.f32 %v1142, %v1154
        %v1156 = vrcp.pop %v971
        %v1157 = vmul.f32 %v1147, %v1156
        %v1158 = vld [vmem:[%s254] sm:$0xff]
        %v1159 = vld [vmem:[%s254 + $0x8] sm:$0xff]
        %v1160 = vld [vmem:[%s254 + $0x10] sm:$0xff]
        %v1161 = vld [vmem:[%s254 + $0x18] sm:$0xff]
        %v1162 = vmul.f32 %v1158, 0.35355338
        %v1163 = vmul.f32 %v1159, 0.35355338
        %v1164 = vmul.f32 %v1160, 0.35355338
        %v1165 = vmul.f32 %v1161, 0.35355338
        %v1166 = vld [vmem:[%s263] sm:$0xff]
        %v1167 = vld [vmem:[%s263 + $0x8] sm:$0xff]
        %v1168 = vld [vmem:[%s263 + $0x10] sm:$0xff]
        %v1169 = vld [vmem:[%s263 + $0x18] sm:$0xff]
        %v1170 = vld [vmem:[%s272] sm:$0xff]
        %v1171 = vld [vmem:[%s272 + $0x8] sm:$0xff]
        %v1172 = vld [vmem:[%s272 + $0x10] sm:$0xff]
        %v1173 = vld [vmem:[%s272 + $0x18] sm:$0xff]
        %1176 = vrot.lane.b32.xlu0 %v1162, 112
        %v1177 = vpop.permute.xlu0 %1176
        %1178 = vrot.lane.b32.xlu0 %v1163, 112
        %v1179 = vpop.permute.xlu0 %1178
        %1182 = vrot.lane.b32.xlu0 %v1166, 112
        %v1183 = vpop.permute.xlu0 %1182
        %1184 = vrot.lane.b32.xlu0 %v1167, 112
        %v1185 = vpop.permute.xlu0 %1184
        %v1186 = vsel %vm331, %v1177, 0
        %v1188 = vsel %vm331, %v1179, 0
        %v1190 = vsel %vm331, %v1183, 0
        %v1192 = vsel %vm331, %v1185, 0
        %1194 = vmatprep.subr.mxu0 0.0
        %1195 = vmatpush1.xpose.msra.mxu0 %v1190
        %1196 = vmatprep.subr.mxu0 0.0
        %1197 = vmatpush1.xpose.msra.mxu0 %v1192
        %1198 = vmatprep.subr.mxu0 0.0
        %1199 = vmatpush1.xpose.msra.mxu0 0.0
        %1200 = vmatprep.subr.mxu0 0.0
        %1201 = vmatpush1.xpose.msra.mxu0 0.0
        %1202 = vmatprep.subr.mxu0 0.0
        %1203 = vmatpush1.xpose.msra.mxu0 0.0
        %1204 = vmatprep.subr.mxu0 0.0
        %1205 = vmatpush1.xpose.msra.mxu0 0.0
        %1206 = vmatprep.subr.mxu0 0.0
        %1207 = vmatpush1.xpose.msra.mxu0 0.0
        %1208 = vmatprep.subr.mxu0 0.0
        %1209 = vmatpush1.xpose.msra.mxu0 0.0
        %1210 = vmatprep.subr.mxu0 0.0
        %1211 = vmatpush1.xpose.msra.mxu0 0.0
        %1212 = vmatprep.subr.mxu0 0.0
        %1213 = vmatpush1.xpose.msra.mxu0 0.0
        %1214 = vmatprep.subr.mxu0 0.0
        %1215 = vmatpush1.xpose.msra.mxu0 0.0
        %1216 = vmatprep.subr.mxu0 0.0
        %1217 = vmatpush1.xpose.msra.mxu0 0.0
        %1218 = vmatprep.subr.mxu0 0.0
        %1219 = vmatpush1.xpose.msra.mxu0 0.0
        %1220 = vmatprep.subr.mxu0 0.0
        %1221 = vmatpush1.xpose.msra.mxu0 0.0
        %1222 = vmatprep.subr.mxu0 0.0
        %1223 = vmatpush1.xpose.msra.mxu0 0.0
        %1224 = vmatprep.subr.mxu0 0.0
        %1225 = vmatpush1.xpose.msra.mxu0 0.0
        %1226 = vmatprep.subr.mxu0 0.0
        %1227 = vmatpush1.xpose.msra.mxu0 0.0
        %1228 = vmatprep.subr.mxu0 0.0
        %1229 = vmatpush1.xpose.msra.mxu0 0.0
        %1230 = vmatprep.subr.mxu0 0.0
        %1231 = vmatpush1.xpose.msra.mxu0 0.0
        %1232 = vmatprep.subr.mxu0 0.0
        %1233 = vmatpush1.xpose.msra.mxu0 0.0
        %1234 = vmatprep.subr.mxu0 0.0
        %1235 = vmatpush1.xpose.msra.mxu0 0.0
        %1236 = vmatprep.subr.mxu0 0.0
        %1237 = vmatpush1.xpose.msra.mxu0 0.0
        %1238 = vmatprep.subr.mxu0 0.0
        %1239 = vmatpush1.xpose.msra.mxu0 0.0
        %1240 = vmatprep.subr.mxu0 0.0
        %1241 = vmatpush1.xpose.msra.mxu0 0.0
        %1242 = vmatprep.subr.mxu0 0.0
        %1243 = vmatpush1.xpose.msra.mxu0 0.0
        %1244 = vmatprep.subr.mxu0 0.0
        %1245 = vmatpush1.xpose.msra.mxu0 0.0
        %1246 = vmatprep.subr.mxu0 0.0
        %1247 = vmatpush1.xpose.msra.mxu0 0.0
        %1248 = vmatprep.subr.mxu0 0.0
        %1249 = vmatpush1.xpose.msra.mxu0 0.0
        %1250 = vmatprep.subr.mxu0 0.0
        %1251 = vmatpush1.xpose.msra.mxu0 0.0
        %1252 = vmatprep.subr.mxu0 0.0
        %1253 = vmatpush1.xpose.msra.mxu0 0.0
        %1254 = vmatprep.subr.mxu0 0.0
        %1255 = vmatpush1.xpose.msra.mxu0 0.0
        %1256 = vmatprep.subr.mxu0 0.0
        %1257 = vmatpush1.xpose.msra.mxu0 0.0
        %1258 = vmatprep.mubr.f32.mxu0 0.0
        %1259 = vmatmul.mubr.f32.gmra.mrb[0].mxu0 %v1186
        %v1260 = vpop.f32.mrb[0].mxu0
        %v1261 = vadd.f32 0.0, %v1260
        %v1262 = vpop.f32.mrb[0].mxu0
        %1263 = vmatprep.mubr.f32.mxu0 0.0
        %1264 = vmatmul.mubr.f32.gmra.mrb[0].mxu0 %v1188
        %v1265 = vpop.f32.mrb[0].mxu0
        %v1266 = vadd.f32 0.0, %v1265
        %v1267 = vpop.f32.mrb[0].mxu0
        %1268 = vdwg.mxu0
        %1271 = vrot.lane.b32.xlu0 %v1164, 112
        %v1272 = vpop.permute.xlu0 %1271
        %1273 = vrot.lane.b32.xlu0 %v1165, 112
        %v1274 = vpop.permute.xlu0 %1273
        %1277 = vrot.lane.b32.xlu0 %v1168, 112
        %v1278 = vpop.permute.xlu0 %1277
        %1279 = vrot.lane.b32.xlu0 %v1169, 112
        %v1280 = vpop.permute.xlu0 %1279
        %v1281 = vsel %vm331, %v1272, 0
        %v1283 = vsel %vm331, %v1274, 0
        %v1285 = vsel %vm331, %v1278, 0
        %v1287 = vsel %vm331, %v1280, 0
        %1289 = vmatprep.subr.mxu0 0.0
        %1290 = vmatpush1.xpose.msra.mxu0 %v1285
        %1291 = vmatprep.subr.mxu0 0.0
        %1292 = vmatpush1.xpose.msra.mxu0 %v1287
        %1293 = vmatprep.subr.mxu0 0.0
        %1294 = vmatpush1.xpose.msra.mxu0 0.0
        %1295 = vmatprep.subr.mxu0 0.0
        %1296 = vmatpush1.xpose.msra.mxu0 0.0
        %1297 = vmatprep.subr.mxu0 0.0
        %1298 = vmatpush1.xpose.msra.mxu0 0.0
        %1299 = vmatprep.subr.mxu0 0.0
        %1300 = vmatpush1.xpose.msra.mxu0 0.0
        %1301 = vmatprep.subr.mxu0 0.0
        %1302 = vmatpush1.xpose.msra.mxu0 0.0
        %1303 = vmatprep.subr.mxu0 0.0
        %1304 = vmatpush1.xpose.msra.mxu0 0.0
        %1305 = vmatprep.subr.mxu0 0.0
        %1306 = vmatpush1.xpose.msra.mxu0 0.0
        %1307 = vmatprep.subr.mxu0 0.0
        %1308 = vmatpush1.xpose.msra.mxu0 0.0
        %1309 = vmatprep.subr.mxu0 0.0
        %1310 = vmatpush1.xpose.msra.mxu0 0.0
        %1311 = vmatprep.subr.mxu0 0.0
        %1312 = vmatpush1.xpose.msra.mxu0 0.0
        %1313 = vmatprep.subr.mxu0 0.0
        %1314 = vmatpush1.xpose.msra.mxu0 0.0
        %1315 = vmatprep.subr.mxu0 0.0
        %1316 = vmatpush1.xpose.msra.mxu0 0.0
        %1317 = vmatprep.subr.mxu0 0.0
        %1318 = vmatpush1.xpose.msra.mxu0 0.0
        %1319 = vmatprep.subr.mxu0 0.0
        %1320 = vmatpush1.xpose.msra.mxu0 0.0
        %1321 = vmatprep.subr.mxu0 0.0
        %1322 = vmatpush1.xpose.msra.mxu0 0.0
        %1323 = vmatprep.subr.mxu0 0.0
        %1324 = vmatpush1.xpose.msra.mxu0 0.0
        %1325 = vmatprep.subr.mxu0 0.0
        %1326 = vmatpush1.xpose.msra.mxu0 0.0
        %1327 = vmatprep.subr.mxu0 0.0
        %1328 = vmatpush1.xpose.msra.mxu0 0.0
        %1329 = vmatprep.subr.mxu0 0.0
        %1330 = vmatpush1.xpose.msra.mxu0 0.0
        %1331 = vmatprep.subr.mxu0 0.0
        %1332 = vmatpush1.xpose.msra.mxu0 0.0
        %1333 = vmatprep.subr.mxu0 0.0
        %1334 = vmatpush1.xpose.msra.mxu0 0.0
        %1335 = vmatprep.subr.mxu0 0.0
        %1336 = vmatpush1.xpose.msra.mxu0 0.0
        %1337 = vmatprep.subr.mxu0 0.0
        %1338 = vmatpush1.xpose.msra.mxu0 0.0
        %1339 = vmatprep.subr.mxu0 0.0
        %1340 = vmatpush1.xpose.msra.mxu0 0.0
        %1341 = vmatprep.subr.mxu0 0.0
        %1342 = vmatpush1.xpose.msra.mxu0 0.0
        %1343 = vmatprep.subr.mxu0 0.0
        %1344 = vmatpush1.xpose.msra.mxu0 0.0
        %1345 = vmatprep.subr.mxu0 0.0
        %1346 = vmatpush1.xpose.msra.mxu0 0.0
        %1347 = vmatprep.subr.mxu0 0.0
        %1348 = vmatpush1.xpose.msra.mxu0 0.0
        %1349 = vmatprep.subr.mxu0 0.0
        %1350 = vmatpush1.xpose.msra.mxu0 0.0
        %1351 = vmatprep.subr.mxu0 0.0
        %1352 = vmatpush1.xpose.msra.mxu0 0.0
        %1353 = vmatprep.mubr.f32.mxu0 0.0
        %1354 = vmatmul.mubr.f32.gmra.mrb[0].mxu0 %v1281
        %v1355 = vpop.f32.mrb[0].mxu0
        %v1356 = vadd.f32 0.0, %v1355
        %v1357 = vpop.f32.mrb[0].mxu0
        %1358 = vmatprep.mubr.f32.mxu0 0.0
        %1359 = vmatmul.mubr.f32.gmra.mrb[0].mxu0 %v1283
        %v1360 = vpop.f32.mrb[0].mxu0
        %v1361 = vadd.f32 0.0, %v1360
        %v1362 = vpop.f32.mrb[0].mxu0
        %1363 = vdwg.mxu0
        %s1364 = scalar_lea.vmem [#allocation8], 64
        %v1365 = vld [vmem:[%s1364] sm:$0xff]
        %v1366 = vld [vmem:[%s1364 + $0x8] sm:$0xff]
        %v1367 = vld [vmem:[%s1364 + $0x10] sm:$0xff]
        %v1368 = vld [vmem:[%s1364 + $0x18] sm:$0xff]
        %v1369 = vadd.f32 %v1261, %v1365
        %v1370 = vadd.f32 %v1266, %v1366
        %v1371 = vadd.f32 %v1356, %v1367
        %v1372 = vadd.f32 %v1361, %v1368
        %v1373 = vsel %vm514, %v1369, -inf
        %1374 = vmax.xlane.f32.xlu0 %v1373
        %v1375 = vpop.xlane.xlu0 %1374
        %v1376 = vsel %vm514, %v1370, -inf
        %1377 = vmax.xlane.f32.xlu0 %v1376
        %v1378 = vpop.xlane.xlu0 %1377
        %v1379 = vsel %vm514, %v1371, -inf
        %1380 = vmax.xlane.f32.xlu0 %v1379
        %v1381 = vpop.xlane.xlu0 %1380
        %v1382 = vsel %vm514, %v1372, -inf
        %1383 = vmax.xlane.f32.xlu0 %v1382
        %v1384 = vpop.xlane.xlu0 %1383
        %v1385 = vsub.f32 %v1369, %v1375
        %v1386 = vsub.f32 %v1370, %v1378
        %v1387 = vsub.f32 %v1371, %v1381
        %v1388 = vsub.f32 %v1372, %v1384
        %v1389 = vmul.f32 %v1385, 1.442695
        %v1390 = vpow.pop %v1389
        %v1391 = vmul.f32 %v1386, 1.442695
        %v1392 = vpow.pop %v1391
        %v1393 = vmul.f32 %v1387, 1.442695
        %v1394 = vpow.pop %v1393
        %v1395 = vmul.f32 %v1388, 1.442695
        %v1396 = vpow.pop %v1395
        %v1397 = vsel %vm514, %v1390, 0.0
        %1398 = vadd.xlane.f32.xlu0 %v1397
        %v1399 = vpop.xlane.xlu0 %1398
        %v1400 = vsel %vm514, %v1392, 0.0
        %1401 = vadd.xlane.f32.xlu0 %v1400
        %v1402 = vpop.xlane.xlu0 %1401
        %v1403 = vsel %vm514, %v1394, 0.0
        %1404 = vadd.xlane.f32.xlu0 %v1403
        %v1405 = vpop.xlane.xlu0 %1404
        %v1406 = vsel %vm514, %v1396, 0.0
        %1407 = vadd.xlane.f32.xlu0 %v1406
        %v1408 = vpop.xlane.xlu0 %1407
        %1411 = vrot.lane.b32.xlu0 %v1170, 112
        %v1412 = vpop.permute.xlu0 %1411
        %1413 = vrot.lane.b32.xlu0 %v1171, 112
        %v1414 = vpop.permute.xlu0 %1413
        %v1418 = vsel %vm514, %v1390, 0
        %v1421 = vsel %vm514, %v1392, 0
        %1423 = vmatprep.subr.mxu0 0.0
        %1424 = vmatpush1.msra.mxu0 %v1412
        %1425 = vmatprep.subr.mxu0 0.0
        %1426 = vmatpush1.msra.mxu0 %v1414
        %1427 = vmatprep.subr.mxu0 0.0
        %1428 = vmatpush1.msra.mxu0 0.0
        %1429 = vmatprep.subr.mxu0 0.0
        %1430 = vmatpush1.msra.mxu0 0.0
        %1431 = vmatprep.subr.mxu0 0.0
        %1432 = vmatpush1.msra.mxu0 0.0
        %1433 = vmatprep.subr.mxu0 0.0
        %1434 = vmatpush1.msra.mxu0 0.0
        %1435 = vmatprep.subr.mxu0 0.0
        %1436 = vmatpush1.msra.mxu0 0.0
        %1437 = vmatprep.subr.mxu0 0.0
        %1438 = vmatpush1.msra.mxu0 0.0
        %1439 = vmatprep.subr.mxu0 0.0
        %1440 = vmatpush1.msra.mxu0 0.0
        %1441 = vmatprep.subr.mxu0 0.0
        %1442 = vmatpush1.msra.mxu0 0.0
        %1443 = vmatprep.subr.mxu0 0.0
        %1444 = vmatpush1.msra.mxu0 0.0
        %1445 = vmatprep.subr.mxu0 0.0
        %1446 = vmatpush1.msra.mxu0 0.0
        %1447 = vmatprep.subr.mxu0 0.0
        %1448 = vmatpush1.msra.mxu0 0.0
        %1449 = vmatprep.subr.mxu0 0.0
        %1450 = vmatpush1.msra.mxu0 0.0
        %1451 = vmatprep.subr.mxu0 0.0
        %1452 = vmatpush1.msra.mxu0 0.0
        %1453 = vmatprep.subr.mxu0 0.0
        %1454 = vmatpush1.msra.mxu0 0.0
        %1455 = vmatprep.subr.mxu0 0.0
        %1456 = vmatpush1.msra.mxu0 0.0
        %1457 = vmatprep.subr.mxu0 0.0
        %1458 = vmatpush1.msra.mxu0 0.0
        %1459 = vmatprep.subr.mxu0 0.0
        %1460 = vmatpush1.msra.mxu0 0.0
        %1461 = vmatprep.subr.mxu0 0.0
        %1462 = vmatpush1.msra.mxu0 0.0
        %1463 = vmatprep.subr.mxu0 0.0
        %1464 = vmatpush1.msra.mxu0 0.0
        %1465 = vmatprep.subr.mxu0 0.0
        %1466 = vmatpush1.msra.mxu0 0.0
        %1467 = vmatprep.subr.mxu0 0.0
        %1468 = vmatpush1.msra.mxu0 0.0
        %1469 = vmatprep.subr.mxu0 0.0
        %1470 = vmatpush1.msra.mxu0 0.0
        %1471 = vmatprep.subr.mxu0 0.0
        %1472 = vmatpush1.msra.mxu0 0.0
        %1473 = vmatprep.subr.mxu0 0.0
        %1474 = vmatpush1.msra.mxu0 0.0
        %1475 = vmatprep.subr.mxu0 0.0
        %1476 = vmatpush1.msra.mxu0 0.0
        %1477 = vmatprep.subr.mxu0 0.0
        %1478 = vmatpush1.msra.mxu0 0.0
        %1479 = vmatprep.subr.mxu0 0.0
        %1480 = vmatpush1.msra.mxu0 0.0
        %1481 = vmatprep.subr.mxu0 0.0
        %1482 = vmatpush1.msra.mxu0 0.0
        %1483 = vmatprep.subr.mxu0 0.0
        %1484 = vmatpush1.msra.mxu0 0.0
        %1485 = vmatprep.subr.mxu0 0.0
        %1486 = vmatpush1.msra.mxu0 0.0
        %1487 = vmatprep.mubr.f32.mxu0 0.0
        %1488 = vmatmul.mubr.f32.gmra.mrb[0].mxu0 %v1418
        %v1489 = vpop.f32.mrb[0].mxu0
        %v1490 = vadd.f32 0.0, %v1489
        %v1491 = vpop.f32.mrb[0].mxu0
        %1492 = vmatprep.mubr.f32.mxu0 0.0
        %1493 = vmatmul.mubr.f32.gmra.mrb[0].mxu0 %v1421
        %v1494 = vpop.f32.mrb[0].mxu0
        %v1495 = vadd.f32 0.0, %v1494
        %v1496 = vpop.f32.mrb[0].mxu0
        %1497 = vdwg.mxu0
        %1500 = vrot.lane.b32.xlu0 %v1172, 112
        %v1501 = vpop.permute.xlu0 %1500
        %1502 = vrot.lane.b32.xlu0 %v1173, 112
        %v1503 = vpop.permute.xlu0 %1502
        %v1507 = vsel %vm514, %v1394, 0
        %v1510 = vsel %vm514, %v1396, 0
        %1512 = vmatprep.subr.mxu0 0.0
        %1513 = vmatpush1.msra.mxu0 %v1501
        %1514 = vmatprep.subr.mxu0 0.0
        %1515 = vmatpush1.msra.mxu0 %v1503
        %1516 = vmatprep.subr.mxu0 0.0
        %1517 = vmatpush1.msra.mxu0 0.0
        %1518 = vmatprep.subr.mxu0 0.0
        %1519 = vmatpush1.msra.mxu0 0.0
        %1520 = vmatprep.subr.mxu0 0.0
        %1521 = vmatpush1.msra.mxu0 0.0
        %1522 = vmatprep.subr.mxu0 0.0
        %1523 = vmatpush1.msra.mxu0 0.0
        %1524 = vmatprep.subr.mxu0 0.0
        %1525 = vmatpush1.msra.mxu0 0.0
        %1526 = vmatprep.subr.mxu0 0.0
        %1527 = vmatpush1.msra.mxu0 0.0
        %1528 = vmatprep.subr.mxu0 0.0
        %1529 = vmatpush1.msra.mxu0 0.0
        %1530 = vmatprep.subr.mxu0 0.0
        %1531 = vmatpush1.msra.mxu0 0.0
        %1532 = vmatprep.subr.mxu0 0.0
        %1533 = vmatpush1.msra.mxu0 0.0
        %1534 = vmatprep.subr.mxu0 0.0
        %1535 = vmatpush1.msra.mxu0 0.0
        %1536 = vmatprep.subr.mxu0 0.0
        %1537 = vmatpush1.msra.mxu0 0.0
        %1538 = vmatprep.subr.mxu0 0.0
        %1539 = vmatpush1.msra.mxu0 0.0
        %1540 = vmatprep.subr.mxu0 0.0
        %1541 = vmatpush1.msra.mxu0 0.0
        %1542 = vmatprep.subr.mxu0 0.0
        %1543 = vmatpush1.msra.mxu0 0.0
        %1544 = vmatprep.subr.mxu0 0.0
        %1545 = vmatpush1.msra.mxu0 0.0
        %1546 = vmatprep.subr.mxu0 0.0
        %1547 = vmatpush1.msra.mxu0 0.0
        %1548 = vmatprep.subr.mxu0 0.0
        %1549 = vmatpush1.msra.mxu0 0.0
        %1550 = vmatprep.subr.mxu0 0.0
        %1551 = vmatpush1.msra.mxu0 0.0
        %1552 = vmatprep.subr.mxu0 0.0
        %1553 = vmatpush1.msra.mxu0 0.0
        %1554 = vmatprep.subr.mxu0 0.0
        %1555 = vmatpush1.msra.mxu0 0.0
        %1556 = vmatprep.subr.mxu0 0.0
        %1557 = vmatpush1.msra.mxu0 0.0
        %1558 = vmatprep.subr.mxu0 0.0
        %1559 = vmatpush1.msra.mxu0 0.0
        %1560 = vmatprep.subr.mxu0 0.0
        %1561 = vmatpush1.msra.mxu0 0.0
        %1562 = vmatprep.subr.mxu0 0.0
        %1563 = vmatpush1.msra.mxu0 0.0
        %1564 = vmatprep.subr.mxu0 0.0
        %1565 = vmatpush1.msra.mxu0 0.0
        %1566 = vmatprep.subr.mxu0 0.0
        %1567 = vmatpush1.msra.mxu0 0.0
        %1568 = vmatprep.subr.mxu0 0.0
        %1569 = vmatpush1.msra.mxu0 0.0
        %1570 = vmatprep.subr.mxu0 0.0
        %1571 = vmatpush1.msra.mxu0 0.0
        %1572 = vmatprep.subr.mxu0 0.0
        %1573 = vmatpush1.msra.mxu0 0.0
        %1574 = vmatprep.subr.mxu0 0.0
        %1575 = vmatpush1.msra.mxu0 0.0
        %1576 = vmatprep.mubr.f32.mxu0 0.0
        %1577 = vmatmul.mubr.f32.gmra.mrb[0].mxu0 %v1507
        %v1578 = vpop.f32.mrb[0].mxu0
        %v1579 = vadd.f32 0.0, %v1578
        %v1580 = vpop.f32.mrb[0].mxu0
        %1581 = vmatprep.mubr.f32.mxu0 0.0
        %1582 = vmatmul.mubr.f32.gmra.mrb[0].mxu0 %v1510
        %v1583 = vpop.f32.mrb[0].mxu0
        %v1584 = vadd.f32 0.0, %v1583
        %v1585 = vpop.f32.mrb[0].mxu0
        %1586 = vdwg.mxu0
        %v1587 = vrcp.pop %v1399
        %v1588 = vmul.f32 %v1490, %v1587
        %v1589 = vrcp.pop %v1402
        %v1590 = vmul.f32 %v1495, %v1589
        %v1591 = vrcp.pop %v1405
        %v1592 = vmul.f32 %v1579, %v1591
        %v1593 = vrcp.pop %v1408
        %v1594 = vmul.f32 %v1584, %v1593
        %v1595 = vld [vmem:[%s254] sm:$0xff]
        %v1596 = vld [vmem:[%s254 + $0x8] sm:$0xff]
        %v1597 = vld [vmem:[%s254 + $0x10] sm:$0xff]
        %v1598 = vld [vmem:[%s254 + $0x18] sm:$0xff]
        %v1599 = vmul.f32 %v1595, 0.35355338
        %v1600 = vmul.f32 %v1596, 0.35355338
        %v1601 = vmul.f32 %v1597, 0.35355338
        %v1602 = vmul.f32 %v1598, 0.35355338
        %v1603 = vld [vmem:[%s263] sm:$0xff]
        %v1604 = vld [vmem:[%s263 + $0x8] sm:$0xff]
        %v1605 = vld [vmem:[%s263 + $0x10] sm:$0xff]
        %v1606 = vld [vmem:[%s263 + $0x18] sm:$0xff]
        %v1607 = vld [vmem:[%s272] sm:$0xff]
        %v1608 = vld [vmem:[%s272 + $0x8] sm:$0xff]
        %v1609 = vld [vmem:[%s272 + $0x10] sm:$0xff]
        %v1610 = vld [vmem:[%s272 + $0x18] sm:$0xff]
        %1613 = vrot.lane.b32.xlu0 %v1599, 104
        %v1614 = vpop.permute.xlu0 %1613
        %1615 = vrot.lane.b32.xlu0 %v1600, 104
        %v1616 = vpop.permute.xlu0 %1615
        %1619 = vrot.lane.b32.xlu0 %v1603, 104
        %v1620 = vpop.permute.xlu0 %1619
        %1621 = vrot.lane.b32.xlu0 %v1604, 104
        %v1622 = vpop.permute.xlu0 %1621
        %v1623 = vsel %vm331, %v1614, 0
        %v1625 = vsel %vm331, %v1616, 0
        %v1627 = vsel %vm331, %v1620, 0
        %v1629 = vsel %vm331, %v1622, 0
        %1631 = vmatprep.subr.mxu0 0.0
        %1632 = vmatpush1.xpose.msra.mxu0 %v1627
        %1633 = vmatprep.subr.mxu0 0.0
        %1634 = vmatpush1.xpose.msra.mxu0 %v1629
        %1635 = vmatprep.subr.mxu0 0.0
        %1636 = vmatpush1.xpose.msra.mxu0 0.0
        %1637 = vmatprep.subr.mxu0 0.0
        %1638 = vmatpush1.xpose.msra.mxu0 0.0
        %1639 = vmatprep.subr.mxu0 0.0
        %1640 = vmatpush1.xpose.msra.mxu0 0.0
        %1641 = vmatprep.subr.mxu0 0.0
        %1642 = vmatpush1.xpose.msra.mxu0 0.0
        %1643 = vmatprep.subr.mxu0 0.0
        %1644 = vmatpush1.xpose.msra.mxu0 0.0
        %1645 = vmatprep.subr.mxu0 0.0
        %1646 = vmatpush1.xpose.msra.mxu0 0.0
        %1647 = vmatprep.subr.mxu0 0.0
        %1648 = vmatpush1.xpose.msra.mxu0 0.0
        %1649 = vmatprep.subr.mxu0 0.0
        %1650 = vmatpush1.xpose.msra.mxu0 0.0
        %1651 = vmatprep.subr.mxu0 0.0
        %1652 = vmatpush1.xpose.msra.mxu0 0.0
        %1653 = vmatprep.subr.mxu0 0.0
        %1654 = vmatpush1.xpose.msra.mxu0 0.0
        %1655 = vmatprep.subr.mxu0 0.0
        %1656 = vmatpush1.xpose.msra.mxu0 0.0
        %1657 = vmatprep.subr.mxu0 0.0
        %1658 = vmatpush1.xpose.msra.mxu0 0.0
        %1659 = vmatprep.subr.mxu0 0.0
        %1660 = vmatpush1.xpose.msra.mxu0 0.0
        %1661 = vmatprep.subr.mxu0 0.0
        %1662 = vmatpush1.xpose.msra.mxu0 0.0
        %1663 = vmatprep.subr.mxu0 0.0
        %1664 = vmatpush1.xpose.msra.mxu0 0.0
        %1665 = vmatprep.subr.mxu0 0.0
        %1666 = vmatpush1.xpose.msra.mxu0 0.0
        %1667 = vmatprep.subr.mxu0 0.0
        %1668 = vmatpush1.xpose.msra.mxu0 0.0
        %1669 = vmatprep.subr.mxu0 0.0
        %1670 = vmatpush1.xpose.msra.mxu0 0.0
        %1671 = vmatprep.subr.mxu0 0.0
        %1672 = vmatpush1.xpose.msra.mxu0 0.0
        %1673 = vmatprep.subr.mxu0 0.0
        %1674 = vmatpush1.xpose.msra.mxu0 0.0
        %1675 = vmatprep.subr.mxu0 0.0
        %1676 = vmatpush1.xpose.msra.mxu0 0.0
        %1677 = vmatprep.subr.mxu0 0.0
        %1678 = vmatpush1.xpose.msra.mxu0 0.0
        %1679 = vmatprep.subr.mxu0 0.0
        %1680 = vmatpush1.xpose.msra.mxu0 0.0
        %1681 = vmatprep.subr.mxu0 0.0
        %1682 = vmatpush1.xpose.msra.mxu0 0.0
        %1683 = vmatprep.subr.mxu0 0.0
        %1684 = vmatpush1.xpose.msra.mxu0 0.0
        %1685 = vmatprep.subr.mxu0 0.0
        %1686 = vmatpush1.xpose.msra.mxu0 0.0
        %1687 = vmatprep.subr.mxu0 0.0
        %1688 = vmatpush1.xpose.msra.mxu0 0.0
        %1689 = vmatprep.subr.mxu0 0.0
        %1690 = vmatpush1.xpose.msra.mxu0 0.0
        %1691 = vmatprep.subr.mxu0 0.0
        %1692 = vmatpush1.xpose.msra.mxu0 0.0
        %1693 = vmatprep.subr.mxu0 0.0
        %1694 = vmatpush1.xpose.msra.mxu0 0.0
        %1695 = vmatprep.mubr.f32.mxu0 0.0
        %1696 = vmatmul.mubr.f32.gmra.mrb[0].mxu0 %v1623
        %v1697 = vpop.f32.mrb[0].mxu0
        %v1698 = vadd.f32 0.0, %v1697
        %v1699 = vpop.f32.mrb[0].mxu0
        %1700 = vmatprep.mubr.f32.mxu0 0.0
        %1701 = vmatmul.mubr.f32.gmra.mrb[0].mxu0 %v1625
        %v1702 = vpop.f32.mrb[0].mxu0
        %v1703 = vadd.f32 0.0, %v1702
        %v1704 = vpop.f32.mrb[0].mxu0
        %1705 = vdwg.mxu0
        %1708 = vrot.lane.b32.xlu0 %v1601, 104
        %v1709 = vpop.permute.xlu0 %1708
        %1710 = vrot.lane.b32.xlu0 %v1602, 104
        %v1711 = vpop.permute.xlu0 %1710
        %1714 = vrot.lane.b32.xlu0 %v1605, 104
        %v1715 = vpop.permute.xlu0 %1714
        %1716 = vrot.lane.b32.xlu0 %v1606, 104
        %v1717 = vpop.permute.xlu0 %1716
        %v1718 = vsel %vm331, %v1709, 0
        %v1720 = vsel %vm331, %v1711, 0
        %v1722 = vsel %vm331, %v1715, 0
        %v1724 = vsel %vm331, %v1717, 0
        %1726 = vmatprep.subr.mxu0 0.0
        %1727 = vmatpush1.xpose.msra.mxu0 %v1722
        %1728 = vmatprep.subr.mxu0 0.0
        %1729 = vmatpush1.xpose.msra.mxu0 %v1724
        %1730 = vmatprep.subr.mxu0 0.0
        %1731 = vmatpush1.xpose.msra.mxu0 0.0
        %1732 = vmatprep.subr.mxu0 0.0
        %1733 = vmatpush1.xpose.msra.mxu0 0.0
        %1734 = vmatprep.subr.mxu0 0.0
        %1735 = vmatpush1.xpose.msra.mxu0 0.0
        %1736 = vmatprep.subr.mxu0 0.0
        %1737 = vmatpush1.xpose.msra.mxu0 0.0
        %1738 = vmatprep.subr.mxu0 0.0
        %1739 = vmatpush1.xpose.msra.mxu0 0.0
        %1740 = vmatprep.subr.mxu0 0.0
        %1741 = vmatpush1.xpose.msra.mxu0 0.0
        %1742 = vmatprep.subr.mxu0 0.0
        %1743 = vmatpush1.xpose.msra.mxu0 0.0
        %1744 = vmatprep.subr.mxu0 0.0
        %1745 = vmatpush1.xpose.msra.mxu0 0.0
        %1746 = vmatprep.subr.mxu0 0.0
        %1747 = vmatpush1.xpose.msra.mxu0 0.0
        %1748 = vmatprep.subr.mxu0 0.0
        %1749 = vmatpush1.xpose.msra.mxu0 0.0
        %1750 = vmatprep.subr.mxu0 0.0
        %1751 = vmatpush1.xpose.msra.mxu0 0.0
        %1752 = vmatprep.subr.mxu0 0.0
        %1753 = vmatpush1.xpose.msra.mxu0 0.0
        %1754 = vmatprep.subr.mxu0 0.0
        %1755 = vmatpush1.xpose.msra.mxu0 0.0
        %1756 = vmatprep.subr.mxu0 0.0
        %1757 = vmatpush1.xpose.msra.mxu0 0.0
        %1758 = vmatprep.subr.mxu0 0.0
        %1759 = vmatpush1.xpose.msra.mxu0 0.0
        %1760 = vmatprep.subr.mxu0 0.0
        %1761 = vmatpush1.xpose.msra.mxu0 0.0
        %1762 = vmatprep.subr.mxu0 0.0
        %1763 = vmatpush1.xpose.msra.mxu0 0.0
        %1764 = vmatprep.subr.mxu0 0.0
        %1765 = vmatpush1.xpose.msra.mxu0 0.0
        %1766 = vmatprep.subr.mxu0 0.0
        %1767 = vmatpush1.xpose.msra.mxu0 0.0
        %1768 = vmatprep.subr.mxu0 0.0
        %1769 = vmatpush1.xpose.msra.mxu0 0.0
        %1770 = vmatprep.subr.mxu0 0.0
        %1771 = vmatpush1.xpose.msra.mxu0 0.0
        %1772 = vmatprep.subr.mxu0 0.0
        %1773 = vmatpush1.xpose.msra.mxu0 0.0
        %1774 = vmatprep.subr.mxu0 0.0
        %1775 = vmatpush1.xpose.msra.mxu0 0.0
        %1776 = vmatprep.subr.mxu0 0.0
        %1777 = vmatpush1.xpose.msra.mxu0 0.0
        %1778 = vmatprep.subr.mxu0 0.0
        %1779 = vmatpush1.xpose.msra.mxu0 0.0
        %1780 = vmatprep.subr.mxu0 0.0
        %1781 = vmatpush1.xpose.msra.mxu0 0.0
        %1782 = vmatprep.subr.mxu0 0.0
        %1783 = vmatpush1.xpose.msra.mxu0 0.0
        %1784 = vmatprep.subr.mxu0 0.0
        %1785 = vmatpush1.xpose.msra.mxu0 0.0
        %1786 = vmatprep.subr.mxu0 0.0
        %1787 = vmatpush1.xpose.msra.mxu0 0.0
        %1788 = vmatprep.subr.mxu0 0.0
        %1789 = vmatpush1.xpose.msra.mxu0 0.0
        %1790 = vmatprep.mubr.f32.mxu0 0.0
        %1791 = vmatmul.mubr.f32.gmra.mrb[0].mxu0 %v1718
        %v1792 = vpop.f32.mrb[0].mxu0
        %v1793 = vadd.f32 0.0, %v1792
        %v1794 = vpop.f32.mrb[0].mxu0
        %1795 = vmatprep.mubr.f32.mxu0 0.0
        %1796 = vmatmul.mubr.f32.gmra.mrb[0].mxu0 %v1720
        %v1797 = vpop.f32.mrb[0].mxu0
        %v1798 = vadd.f32 0.0, %v1797
        %v1799 = vpop.f32.mrb[0].mxu0
        %1800 = vdwg.mxu0
        %s1801 = scalar_lea.vmem [#allocation8], 96
        %v1802 = vld [vmem:[%s1801] sm:$0xff]
        %v1803 = vld [vmem:[%s1801 + $0x8] sm:$0xff]
        %v1804 = vld [vmem:[%s1801 + $0x10] sm:$0xff]
        %v1805 = vld [vmem:[%s1801 + $0x18] sm:$0xff]
        %v1806 = vadd.f32 %v1698, %v1802
        %v1807 = vadd.f32 %v1703, %v1803
        %v1808 = vadd.f32 %v1793, %v1804
        %v1809 = vadd.f32 %v1798, %v1805
        %v1810 = vsel %vm514, %v1806, -inf
        %1811 = vmax.xlane.f32.xlu0 %v1810
        %v1812 = vpop.xlane.xlu0 %1811
        %v1813 = vsel %vm514, %v1807, -inf
        %1814 = vmax.xlane.f32.xlu0 %v1813
        %v1815 = vpop.xlane.xlu0 %1814
        %v1816 = vsel %vm514, %v1808, -inf
        %1817 = vmax.xlane.f32.xlu0 %v1816
        %v1818 = vpop.xlane.xlu0 %1817
        %v1819 = vsel %vm514, %v1809, -inf
        %1820 = vmax.xlane.f32.xlu0 %v1819
        %v1821 = vpop.xlane.xlu0 %1820
        %v1822 = vsub.f32 %v1806, %v1812
        %v1823 = vsub.f32 %v1807, %v1815
        %v1824 = vsub.f32 %v1808, %v1818
        %v1825 = vsub.f32 %v1809, %v1821
        %v1826 = vmul.f32 %v1822, 1.442695
        %v1827 = vpow.pop %v1826
        %v1828 = vmul.f32 %v1823, 1.442695
        %v1829 = vpow.pop %v1828
        %v1830 = vmul.f32 %v1824, 1.442695
        %v1831 = vpow.pop %v1830
        %v1832 = vmul.f32 %v1825, 1.442695
        %v1833 = vpow.pop %v1832
        %v1834 = vsel %vm514, %v1827, 0.0
        %1835 = vadd.xlane.f32.xlu0 %v1834
        %v1836 = vpop.xlane.xlu0 %1835
        %v1837 = vsel %vm514, %v1829, 0.0
        %1838 = vadd.xlane.f32.xlu0 %v1837
        %v1839 = vpop.xlane.xlu0 %1838
        %v1840 = vsel %vm514, %v1831, 0.0
        %1841 = vadd.xlane.f32.xlu0 %v1840
        %v1842 = vpop.xlane.xlu0 %1841
        %v1843 = vsel %vm514, %v1833, 0.0
        %1844 = vadd.xlane.f32.xlu0 %v1843
        %v1845 = vpop.xlane.xlu0 %1844
        %1848 = vrot.lane.b32.xlu0 %v1607, 104
        %v1849 = vpop.permute.xlu0 %1848
        %1850 = vrot.lane.b32.xlu0 %v1608, 104
        %v1851 = vpop.permute.xlu0 %1850
        %v1855 = vsel %vm514, %v1827, 0
        %v1858 = vsel %vm514, %v1829, 0
        %1860 = vmatprep.subr.mxu0 0.0
        %1861 = vmatpush1.msra.mxu0 %v1849
        %1862 = vmatprep.subr.mxu0 0.0
        %1863 = vmatpush1.msra.mxu0 %v1851
        %1864 = vmatprep.subr.mxu0 0.0
        %1865 = vmatpush1.msra.mxu0 0.0
        %1866 = vmatprep.subr.mxu0 0.0
        %1867 = vmatpush1.msra.mxu0 0.0
        %1868 = vmatprep.subr.mxu0 0.0
        %1869 = vmatpush1.msra.mxu0 0.0
        %1870 = vmatprep.subr.mxu0 0.0
        %1871 = vmatpush1.msra.mxu0 0.0
        %1872 = vmatprep.subr.mxu0 0.0
        %1873 = vmatpush1.msra.mxu0 0.0
        %1874 = vmatprep.subr.mxu0 0.0
        %1875 = vmatpush1.msra.mxu0 0.0
        %1876 = vmatprep.subr.mxu0 0.0
        %1877 = vmatpush1.msra.mxu0 0.0
        %1878 = vmatprep.subr.mxu0 0.0
        %1879 = vmatpush1.msra.mxu0 0.0
        %1880 = vmatprep.subr.mxu0 0.0
        %1881 = vmatpush1.msra.mxu0 0.0
        %1882 = vmatprep.subr.mxu0 0.0
        %1883 = vmatpush1.msra.mxu0 0.0
        %1884 = vmatprep.subr.mxu0 0.0
        %1885 = vmatpush1.msra.mxu0 0.0
        %1886 = vmatprep.subr.mxu0 0.0
        %1887 = vmatpush1.msra.mxu0 0.0
        %1888 = vmatprep.subr.mxu0 0.0
        %1889 = vmatpush1.msra.mxu0 0.0
        %1890 = vmatprep.subr.mxu0 0.0
        %1891 = vmatpush1.msra.mxu0 0.0
        %1892 = vmatprep.subr.mxu0 0.0
        %1893 = vmatpush1.msra.mxu0 0.0
        %1894 = vmatprep.subr.mxu0 0.0
        %1895 = vmatpush1.msra.mxu0 0.0
        %1896 = vmatprep.subr.mxu0 0.0
        %1897 = vmatpush1.msra.mxu0 0.0
        %1898 = vmatprep.subr.mxu0 0.0
        %1899 = vmatpush1.msra.mxu0 0.0
        %1900 = vmatprep.subr.mxu0 0.0
        %1901 = vmatpush1.msra.mxu0 0.0
        %1902 = vmatprep.subr.mxu0 0.0
        %1903 = vmatpush1.msra.mxu0 0.0
        %1904 = vmatprep.subr.mxu0 0.0
        %1905 = vmatpush1.msra.mxu0 0.0
        %1906 = vmatprep.subr.mxu0 0.0
        %1907 = vmatpush1.msra.mxu0 0.0
        %1908 = vmatprep.subr.mxu0 0.0
        %1909 = vmatpush1.msra.mxu0 0.0
        %1910 = vmatprep.subr.mxu0 0.0
        %1911 = vmatpush1.msra.mxu0 0.0
        %1912 = vmatprep.subr.mxu0 0.0
        %1913 = vmatpush1.msra.mxu0 0.0
        %1914 = vmatprep.subr.mxu0 0.0
        %1915 = vmatpush1.msra.mxu0 0.0
        %1916 = vmatprep.subr.mxu0 0.0
        %1917 = vmatpush1.msra.mxu0 0.0
        %1918 = vmatprep.subr.mxu0 0.0
        %1919 = vmatpush1.msra.mxu0 0.0
        %1920 = vmatprep.subr.mxu0 0.0
        %1921 = vmatpush1.msra.mxu0 0.0
        %1922 = vmatprep.subr.mxu0 0.0
        %1923 = vmatpush1.msra.mxu0 0.0
        %1924 = vmatprep.mubr.f32.mxu0 0.0
        %1925 = vmatmul.mubr.f32.gmra.mrb[0].mxu0 %v1855
        %v1926 = vpop.f32.mrb[0].mxu0
        %v1927 = vadd.f32 0.0, %v1926
        %v1928 = vpop.f32.mrb[0].mxu0
        %1929 = vmatprep.mubr.f32.mxu0 0.0
        %1930 = vmatmul.mubr.f32.gmra.mrb[0].mxu0 %v1858
        %v1931 = vpop.f32.mrb[0].mxu0
        %v1932 = vadd.f32 0.0, %v1931
        %v1933 = vpop.f32.mrb[0].mxu0
        %1934 = vdwg.mxu0
        %1937 = vrot.lane.b32.xlu0 %v1609, 104
        %v1938 = vpop.permute.xlu0 %1937
        %1939 = vrot.lane.b32.xlu0 %v1610, 104
        %v1940 = vpop.permute.xlu0 %1939
        %v1944 = vsel %vm514, %v1831, 0
        %v1947 = vsel %vm514, %v1833, 0
        %1949 = vmatprep.subr.mxu0 0.0
        %1950 = vmatpush1.msra.mxu0 %v1938
        %1951 = vmatprep.subr.mxu0 0.0
        %1952 = vmatpush1.msra.mxu0 %v1940
        %1953 = vmatprep.subr.mxu0 0.0
        %1954 = vmatpush1.msra.mxu0 0.0
        %1955 = vmatprep.subr.mxu0 0.0
        %1956 = vmatpush1.msra.mxu0 0.0
        %1957 = vmatprep.subr.mxu0 0.0
        %1958 = vmatpush1.msra.mxu0 0.0
        %1959 = vmatprep.subr.mxu0 0.0
        %1960 = vmatpush1.msra.mxu0 0.0
        %1961 = vmatprep.subr.mxu0 0.0
        %1962 = vmatpush1.msra.mxu0 0.0
        %1963 = vmatprep.subr.mxu0 0.0
        %1964 = vmatpush1.msra.mxu0 0.0
        %1965 = vmatprep.subr.mxu0 0.0
        %1966 = vmatpush1.msra.mxu0 0.0
        %1967 = vmatprep.subr.mxu0 0.0
        %1968 = vmatpush1.msra.mxu0 0.0
        %1969 = vmatprep.subr.mxu0 0.0
        %1970 = vmatpush1.msra.mxu0 0.0
        %1971 = vmatprep.subr.mxu0 0.0
        %1972 = vmatpush1.msra.mxu0 0.0
        %1973 = vmatprep.subr.mxu0 0.0
        %1974 = vmatpush1.msra.mxu0 0.0
        %1975 = vmatprep.subr.mxu0 0.0
        %1976 = vmatpush1.msra.mxu0 0.0
        %1977 = vmatprep.subr.mxu0 0.0
        %1978 = vmatpush1.msra.mxu0 0.0
        %1979 = vmatprep.subr.mxu0 0.0
        %1980 = vmatpush1.msra.mxu0 0.0
        %1981 = vmatprep.subr.mxu0 0.0
        %1982 = vmatpush1.msra.mxu0 0.0
        %1983 = vmatprep.subr.mxu0 0.0
        %1984 = vmatpush1.msra.mxu0 0.0
        %1985 = vmatprep.subr.mxu0 0.0
        %1986 = vmatpush1.msra.mxu0 0.0
        %1987 = vmatprep.subr.mxu0 0.0
        %1988 = vmatpush1.msra.mxu0 0.0
        %1989 = vmatprep.subr.mxu0 0.0
        %1990 = vmatpush1.msra.mxu0 0.0
        %1991 = vmatprep.subr.mxu0 0.0
        %1992 = vmatpush1.msra.mxu0 0.0
        %1993 = vmatprep.subr.mxu0 0.0
        %1994 = vmatpush1.msra.mxu0 0.0
        %1995 = vmatprep.subr.mxu0 0.0
        %1996 = vmatpush1.msra.mxu0 0.0
        %1997 = vmatprep.subr.mxu0 0.0
        %1998 = vmatpush1.msra.mxu0 0.0
        %1999 = vmatprep.subr.mxu0 0.0
        %2000 = vmatpush1.msra.mxu0 0.0
        %2001 = vmatprep.subr.mxu0 0.0
        %2002 = vmatpush1.msra.mxu0 0.0
        %2003 = vmatprep.subr.mxu0 0.0
        %2004 = vmatpush1.msra.mxu0 0.0
        %2005 = vmatprep.subr.mxu0 0.0
        %2006 = vmatpush1.msra.mxu0 0.0
        %2007 = vmatprep.subr.mxu0 0.0
        %2008 = vmatpush1.msra.mxu0 0.0
        %2009 = vmatprep.subr.mxu0 0.0
        %2010 = vmatpush1.msra.mxu0 0.0
        %2011 = vmatprep.subr.mxu0 0.0
        %2012 = vmatpush1.msra.mxu0 0.0
        %2013 = vmatprep.mubr.f32.mxu0 0.0
        %2014 = vmatmul.mubr.f32.gmra.mrb[0].mxu0 %v1944
        %v2015 = vpop.f32.mrb[0].mxu0
        %v2016 = vadd.f32 0.0, %v2015
        %v2017 = vpop.f32.mrb[0].mxu0
        %2018 = vmatprep.mubr.f32.mxu0 0.0
        %2019 = vmatmul.mubr.f32.gmra.mrb[0].mxu0 %v1947
        %v2020 = vpop.f32.mrb[0].mxu0
        %v2021 = vadd.f32 0.0, %v2020
        %v2022 = vpop.f32.mrb[0].mxu0
        %2023 = vdwg.mxu0
        %v2024 = vrcp.pop %v1836
        %v2025 = vmul.f32 %v1927, %v2024
        %v2026 = vrcp.pop %v1839
        %v2027 = vmul.f32 %v1932, %v2026
        %v2028 = vrcp.pop %v1842
        %v2029 = vmul.f32 %v2016, %v2028
        %v2030 = vrcp.pop %v1845
        %v2031 = vmul.f32 %v2021, %v2030
        %2036 = vrot.lane.b32.xlu0 %v1151, 8
        %v2037 = vpop.permute.xlu0 %2036
        %2038 = vrot.lane.b32.xlu0 %v1153, 8
        %v2039 = vpop.permute.xlu0 %2038
        %2040 = vrot.lane.b32.xlu0 %v1155, 8
        %v2041 = vpop.permute.xlu0 %2040
        %2042 = vrot.lane.b32.xlu0 %v1157, 8
        %v2043 = vpop.permute.xlu0 %2042
        %2052 = vrot.lane.b32.xlu0 %v1588, 16
        %v2053 = vpop.permute.xlu0 %2052
        %2054 = vrot.lane.b32.xlu0 %v1590, 16
        %v2055 = vpop.permute.xlu0 %2054
        %2056 = vrot.lane.b32.xlu0 %v1592, 16
        %v2057 = vpop.permute.xlu0 %2056
        %2058 = vrot.lane.b32.xlu0 %v1594, 16
        %v2059 = vpop.permute.xlu0 %2058
        %2068 = vrot.lane.b32.xlu0 %v2025, 24
        %v2069 = vpop.permute.xlu0 %2068
        %2070 = vrot.lane.b32.xlu0 %v2027, 24
        %v2071 = vpop.permute.xlu0 %2070
        %2072 = vrot.lane.b32.xlu0 %v2029, 24
        %v2073 = vpop.permute.xlu0 %2072
        %2074 = vrot.lane.b32.xlu0 %v2031, 24
        %v2075 = vpop.permute.xlu0 %2074
        %v2080 = vsel %vm331, %v714, %v2037
        %v2081 = vsel %vm331, %v716, %v2039
        %v2082 = vsel %vm331, %v718, %v2041
        %v2083 = vsel %vm331, %v720, %v2043
        %v2084 = vsel %vm514, %v2080, %v2053
        %v2085 = vsel %vm514, %v2081, %v2055
        %v2086 = vsel %vm514, %v2082, %v2057
        %v2087 = vsel %vm514, %v2083, %v2059
        %vm2088 = vcmask 195584
        %v2089 = vsel %vm2088, %v2084, %v2069
        %v2090 = vsel %vm2088, %v2085, %v2071
        %v2091 = vsel %vm2088, %v2086, %v2073
        %v2092 = vsel %vm2088, %v2087, %v2075
        %vm2093 = vcmask 261120
        %2094 = vst.msk [vmem:[%s310] sm:$0xff] %vm2093, %v2089
        %2095 = vst.msk [vmem:[%s310 + $0x8] sm:$0xff] %vm2093, %v2090
        %2096 = vst.msk [vmem:[%s310 + $0x10] sm:$0xff] %vm2093, %v2091
        %2097 = vst.msk [vmem:[%s310 + $0x18] sm:$0xff] %vm2093, %v2092
        %s2098 = sand.u32 %s132, 1
        %s2099 = scalar_lea.sflag [#allocation4], %s2098
        %s2100 = sand.u32 %s132, 1
        %s2101 = smul.addr %s2100, 32
        %s2102 = scalar_lea.vmem [#allocation10], %s2101
        // Predicated region
        $region53: #{tpu_custom_call.1} parent=35 // pred_check
          %p2103 = pneg %p142
        $region54: #{tpu_custom_call.1} parent=35 // pred_check_branch
          %2105 = sbr.rel (%p2103) target = $region56
        $region55: #{tpu_custom_call.1} parent=35 // pred_region
          %s2106 = smul.u32 2, %s25
          %s2108 = ssub.s32 512, 512
          %2109 = vsyncadd %s2099, %s2108
          %s2110 = smul.addr %s2106, 2
          %s2111 = smul.addr %s2110, 128
          %s2112 = scalar_lea.hbm %s4, %s2111
          %s2113 = sshll.u32 %s2102, 4
          %s2114 = int_to_ptr.vmem [resolvable:$true] %s2113
          %2119 = dma.vmem_to_hbm [thread:$0]  %s2114, 512, %s2112, %s2099, 128, 128, 8
        $region56: #{tpu_custom_call.1} parent=35 // pred_fallthru
          _
      $region36: #{tpu_custom_call.1} parent=5 // pred_fallthru
        _
      %p2120 = scmp.le.s32.totalorder 2, %s20
      // Predicated region
      $region57: #{tpu_custom_call.1} parent=5 // pred_check
        %p2121 = pneg %p2120
      $region58: #{tpu_custom_call.1} parent=5 // pred_check_branch
        %2123 = sbr.rel (%p2121) target = $region60
      $region59: #{tpu_custom_call.1} parent=5 // pred_region
        %s2124 = ssub.s32 %s20, 2
        // Predicated region
        $region61: #{tpu_custom_call.1} parent=59 // pred_check
          %p2125 = pneg %p148
        $region62: #{tpu_custom_call.1} parent=59 // pred_check_branch
          %2127 = sbr.rel (%p2125) target = $region64
        $region63: #{tpu_custom_call.1} parent=59 // pred_region
          %s2128 = sand.u32 %s133, 1
          %s2129 = scalar_lea.sflag [#allocation4], %s2128
          %s2130 = sand.u32 %s133, 1
          %s2131 = smul.addr %s2130, 32
          %s2132 = scalar_lea.vmem [#allocation10], %s2131
          %2133 = dma.done %s2129, 512
        $region64: #{tpu_custom_call.1} parent=59 // pred_fallthru
          _
      $region60: #{tpu_custom_call.1} parent=5 // pred_fallthru
        _
    $region6: #{tpu_custom_call.1} parent=1 // loop_footer
      %s24 = sadd.s32 1, %s20
    $region7: #{tpu_custom_call.1} parent=1 // loop_footer_branch
      %19 = sbr.rel target = $region3
    $region8: #{tpu_custom_call.1} parent=1 // loop_exit
      _
    %2134 = vsyncpa [#allocation3], 1
    %s2135 = scalar_lea.sflag [#allocation3], 1
    %2136 = vsyncpa %s2135, 1
    %2137 = vsyncpa [#allocation6], 1
    %s2138 = scalar_lea.sflag [#allocation6], 1
    %2139 = vsyncpa %s2138, 1
    %2140 = vsyncpa [#allocation9], 1
    %2141 = vsyncpa [#allocation4], 1
    %s2142 = scalar_lea.sflag [#allocation4], 1
    %2143 = vsyncpa %s2142, 1

</llo_original>
